<compile_context>
chip_gen: v7x
topology: tpu7x:2x2x1
jax: 0.10.0
libtpu: 0.0.40
codegen_flags: <defaults>
</compile_context>

<pallas_src>
import functools
import math

import jax
import jax.numpy as jnp
from jax import lax
from jax.experimental import pallas as pl
from jax.experimental.pallas import tpu as pltpu


def decoder_block_kernel(x_ref, kv_ref, w_in_ref, wo_ref, w1_ref, w2_ref, b_ref, o_ref,
                         *, num_heads, compute_dtype):
    """One query block (all batch elements) per grid step.

    x_ref:    (tq,  B, E)  query rows for this grid step (original seq-major layout)
    kv_ref:   (Lkv, B, E)  full cat(past, x) keys/values (constant index_map -> resident)
    w_in_ref: (E, 3E)      fused in-projection [Wq*scale | Wk | Wv]      (compute_dtype)
    wo_ref:   (E, E)       output projection                              (compute_dtype)
    w1_ref:   (E, 4E)      FFN first linear                               (compute_dtype)
    w2_ref:   (4E, E)      FFN second linear                              (compute_dtype)
    b_ref:    (1, 9E)      packed biases [bq*scale | bk | bv | bo | b1(4E) | b2]   (f32)
    o_ref:    (tq,  B, E)  block output
    """
    H = num_heads
    cd = compute_dtype
    tq, B, E = x_ref.shape
    Lkv = kv_ref.shape[0]
    D = E // H
    Mq = tq * B
    Mkv = Lkv * B

    # --- lane-dense in-projections: one matmul with N=E (q), one with N=2E (k|v) ---
    xr = x_ref[...].reshape(Mq, E).astype(cd)        # rows ordered (seq-major, batch-minor)
    kvr = kv_ref[...].reshape(Mkv, E).astype(cd)

    q2d = jnp.dot(xr, w_in_ref[:, :E],
                  preferred_element_type=jnp.float32) + b_ref[:, 0:E]           # (Mq, E)
    kv2d = jnp.dot(kvr, w_in_ref[:, E:],
                   preferred_element_type=jnp.float32) + b_ref[:, E:3 * E]      # (Mkv, 2E)
    k2d = kv2d[:, :E]                                # E-aligned lane slices
    v2d = kv2d[:, E:]

    # --- split heads once (XLU transpose), collapse (B, H) into a single batch dim ---
    qh = q2d.reshape(tq, B, H, D).transpose(1, 2, 0, 3).reshape(B * H, tq, D)
    kh = k2d.reshape(Lkv, B, H, D).transpose(1, 2, 0, 3).reshape(B * H, Lkv, D)
    vh = v2d.reshape(Lkv, B, H, D).transpose(1, 2, 0, 3).reshape(B * H, Lkv, D)

    dn_qk = (((2,), (2,)), ((0,), (0,)))             # (BH,tq,D) x (BH,Lkv,D) -> (BH,tq,Lkv)
    dn_pv = (((2,), (1,)), ((0,), (0,)))             # (BH,tq,Lkv) x (BH,Lkv,D) -> (BH,tq,D)

    # scale already folded into Wq / bq host-side
    s = lax.dot_general(qh.astype(cd), kh.astype(cd), dn_qk,
                        preferred_element_type=jnp.float32)
    s = s - jnp.max(s, axis=-1, keepdims=True)
    p = jnp.exp(s)
    p = p * pl.reciprocal(jnp.sum(p, axis=-1, keepdims=True), approx=True)
    ctx = lax.dot_general(p.astype(cd), vh.astype(cd), dn_pv,
                          preferred_element_type=jnp.float32)                    # (BH,tq,D)

    # --- re-concat heads (one XLU transpose) and do a single K=E output projection ---
    ctx2d = ctx.reshape(B, H, tq, D).transpose(2, 0, 1, 3).reshape(Mq, E).astype(cd)
    attn = jnp.dot(ctx2d, wo_ref[...],
                   preferred_element_type=jnp.float32) + b_ref[:, 3 * E:4 * E]   # (Mq, E)

    # --- FFN: Linear(E, 4E) -> ReLU -> Linear(4E, E) ---
    hdn = jnp.dot(attn.astype(cd), w1_ref[...],
                  preferred_element_type=jnp.float32) + b_ref[:, 4 * E:8 * E]
    hdn = jnp.maximum(hdn, 0.0)
    y = jnp.dot(hdn.astype(cd), w2_ref[...],
                preferred_element_type=jnp.float32) + b_ref[:, 8 * E:9 * E]

    o_ref[...] = y.reshape(tq, B, E).astype(o_ref.dtype)


def init_params(key, embed_dim, num_heads):
    """Deterministic init matching nn.MultiheadAttention / FFN, pre-packed for the kernel."""
    E = embed_dim
    D = E // num_heads
    scale = 1.0 / math.sqrt(D)
    ks = jax.random.split(key, 8)
    in_proj_w = jax.random.normal(ks[0], (3 * E, E), jnp.float32) * 0.02   # PyTorch (out, in)
    in_proj_b = jax.random.normal(ks[1], (3 * E,), jnp.float32) * 0.02
    out_proj_w = jax.random.normal(ks[2], (E, E), jnp.float32) * 0.02
    out_proj_b = jax.random.normal(ks[3], (E,), jnp.float32) * 0.02
    w1 = jax.random.normal(ks[4], (4 * E, E), jnp.float32) * 0.02          # Linear(E,4E).weight
    b1 = jax.random.normal(ks[5], (4 * E,), jnp.float32) * 0.02
    w2 = jax.random.normal(ks[6], (E, 4 * E), jnp.float32) * 0.02          # Linear(4E,E).weight
    b2 = jax.random.normal(ks[7], (E,), jnp.float32) * 0.02

    # PyTorch stores (out, in); kernel wants (in, out). Fold 1/sqrt(D) into the q projection.
    wq_t = in_proj_w[:E].T * scale
    wk_t = in_proj_w[E:2 * E].T
    wv_t = in_proj_w[2 * E:].T
    w_in = jnp.concatenate([wq_t, wk_t, wv_t], axis=1)                     # (E, 3E)
    b_all = jnp.concatenate([in_proj_b[:E] * scale, in_proj_b[E:2 * E], in_proj_b[2 * E:],
                             out_proj_b, b1, b2]).reshape(1, 9 * E)        # (1, 9E)

    return dict(w_in=w_in, wo=out_proj_w.T, w1=w1.T, w2=w2.T, b=b_all)


def simple_decoder_block(x, params, past_kv=None, *, num_heads,
                         compute_dtype=jnp.bfloat16, q_blocks=2):
    """x: (seq_len, batch, embed_dim) fp32, matching the PyTorch forward.

    compute_dtype: dtype of the matmul operands (accumulation is always fp32). bf16 is the
      MXU-native default; pass jnp.float32 for numerics closest to the fp32 PyTorch module.
    q_blocks: number of grid steps the query sequence is split into ("parallel" axis).
      2 keeps both v7x TensorCores busy; use 1 on single-TC chips (v5e/v6e) to minimise
      per-step overhead and avoid re-projecting K/V per query block.
    """
    if past_kv:
        # The reference module's cache always has k == v == cat(past, x): store it once.
        kv = jnp.concatenate([past_kv['k'], x], axis=0)
    else:
        kv = x
    new_past_kv = {'k': kv, 'v': kv}

    L, B, E = x.shape
    Lkv = kv.shape[0]

    qb = q_blocks if (q_blocks >= 1 and L % q_blocks == 0) else 1
    tq = L // qb

    p = dict(params)
    if compute_dtype != jnp.float32:
        for name in ('w_in', 'wo', 'w1', 'w2'):
            p[name] = p[name].astype(compute_dtype)
    weights = (p['w_in'], p['wo'], p['w1'], p['w2'], p['b'])

    def whole(arr):
        # Constant index_map: the same block is reused (not re-fetched) every grid step.
        zeros = (0,) * arr.ndim
        return pl.BlockSpec(arr.shape, lambda i, _z=zeros: _z)

    # VMEM budget from actual block sizes (double-buffered activations + resident weights
    # + headroom), clamped to v7x's 64 MiB physical VMEM.
    def nbytes(shape, dtype):
        return math.prod(shape) * jnp.dtype(dtype).itemsize

    act_bytes = 2 * nbytes((tq, B, E), x.dtype) + nbytes((Lkv, B, E), kv.dtype)
    w_bytes = sum(nbytes(a.shape, a.dtype) for a in weights)
    vmem_limit = min(64 * 1024 * 1024,
                     max(16 * 1024 * 1024, 4 * (2 * act_bytes + w_bytes)))

    kernel = functools.partial(decoder_block_kernel, num_heads=num_heads,
                               compute_dtype=compute_dtype)

    out = pl.pallas_call(
        kernel,
        out_shape=jax.ShapeDtypeStruct((L, B, E), x.dtype),
        grid=(qb,),
        in_specs=[
            # Query rows for this step, in the original (seq, batch, embed) layout
            # (last two block dims equal the full array dims -> no alignment issue).
            pl.BlockSpec((tq, B, E), lambda i: (i, 0, 0)),
            # Full KV cache; constant index_map -> fetched once and kept resident.
            # TODO(synk): pipeline this block along Lkv for very long caches (v7x 64 MiB VMEM).
            pl.BlockSpec((Lkv, B, E), lambda i: (0, 0, 0)),
            whole(p['w_in']), whole(p['wo']), whole(p['w1']), whole(p['w2']), whole(p['b']),
        ],
        out_specs=pl.BlockSpec((tq, B, E), lambda i: (i, 0, 0)),
        compiler_params=pltpu.CompilerParams(
            dimension_semantics=("parallel",),
            vmem_limit_bytes=vmem_limit,
        ),
    )(x, kv, *weights)

    return out, new_past_kv


if __name__ == "__main__":
    seq_len, batch, embed_dim, num_heads = 8, 2, 32, 4

    key = jax.random.PRNGKey(0)
    k_x, k_x2, k_params = jax.random.split(key, 3)
    params = init_params(k_params, embed_dim, num_heads)

    # First step: no cache (Lkv = 8).
    x0 = jax.random.normal(k_x, (seq_len, batch, embed_dim), jnp.float32)
    out0, cache = simple_decoder_block(x0, params, past_kv=None, num_heads=num_heads)
    jax.block_until_ready(out0)

    # Second step: reuse the returned KV cache (exercises the concat path, Lkv = 16).
    x1 = jax.random.normal(k_x2, (seq_len, batch, embed_dim), jnp.float32)
    out1, cache1 = simple_decoder_block(x1, params, past_kv=cache, num_heads=num_heads)
    jax.block_until_ready(out1)
    jax.block_until_ready(cache1['k'])
    jax.block_until_ready(cache1['v'])

    assert out0.shape == (seq_len, batch, embed_dim)
    assert out1.shape == (seq_len, batch, embed_dim)
    assert cache1['k'].shape == (2 * seq_len, batch, embed_dim)
    assert cache1['v'].shape == (2 * seq_len, batch, embed_dim)

    print("KERNEL_OK")
</pallas_src>

<mosaic_0001>
module attributes {stable_mosaic.version = 11 : i64} {
  func.func @decoder_block_kernel(%arg0: i32, %arg1: memref<4x2x32xf32, #tpu.memory_space<vmem>>, %arg2: memref<8x2x32xf32, #tpu.memory_space<vmem>>, %arg3: memref<32x96xbf16, #tpu.memory_space<vmem>>, %arg4: memref<32x32xbf16, #tpu.memory_space<vmem>>, %arg5: memref<32x128xbf16, #tpu.memory_space<vmem>>, %arg6: memref<128x32xbf16, #tpu.memory_space<vmem>>, %arg7: memref<1x288xf32, #tpu.memory_space<vmem>>, %arg8: memref<4x2x32xf32, #tpu.memory_space<vmem>>) attributes {dimension_semantics = [#tpu.dimension_semantics<parallel>], iteration_bounds = array<i64: 2>, scalar_prefetch = 0 : i64, scratch_operands = 0 : i64, tpu.core_type = #tpu.core_type<tc>, window_params = [{transform_indices = @transform_0, window_bounds = array<i64: 4, 2, 32>}, {pipeline_mode = #tpu.pipeline_mode<synchronous>, transform_indices = @transform_1, window_bounds = array<i64: 8, 2, 32>}, {pipeline_mode = #tpu.pipeline_mode<synchronous>, transform_indices = @transform_2, window_bounds = array<i64: 32, 96>}, {pipeline_mode = #tpu.pipeline_mode<synchronous>, transform_indices = @transform_3, window_bounds = array<i64: 32, 32>}, {pipeline_mode = #tpu.pipeline_mode<synchronous>, transform_indices = @transform_4, window_bounds = array<i64: 32, 128>}, {pipeline_mode = #tpu.pipeline_mode<synchronous>, transform_indices = @transform_5, window_bounds = array<i64: 128, 32>}, {pipeline_mode = #tpu.pipeline_mode<synchronous>, transform_indices = @transform_6, window_bounds = array<i64: 1, 288>}, {transform_indices = @transform_7, window_bounds = array<i64: 4, 2, 32>}]} {
    %c0 = arith.constant 0 : index
    %c0_0 = arith.constant 0 : index
    %c0_1 = arith.constant 0 : index
    %0 = vector.load %arg1[%c0, %c0_0, %c0_1] : memref<4x2x32xf32, #tpu.memory_space<vmem>>, vector<4x2x32xf32>
    %1 = vector.shape_cast %0 : vector<4x2x32xf32> to vector<8x32xf32>
    %2 = arith.truncf %1 : vector<8x32xf32> to vector<8x32xbf16>
    %c0_2 = arith.constant 0 : index
    %c0_3 = arith.constant 0 : index
    %c0_4 = arith.constant 0 : index
    %3 = vector.load %arg2[%c0_2, %c0_3, %c0_4] : memref<8x2x32xf32, #tpu.memory_space<vmem>>, vector<8x2x32xf32>
    %4 = vector.shape_cast %3 : vector<8x2x32xf32> to vector<16x32xf32>
    %5 = arith.truncf %4 : vector<16x32xf32> to vector<16x32xbf16>
    %c0_5 = arith.constant 0 : index
    %c0_6 = arith.constant 0 : index
    %6 = vector.load %arg3[%c0_5, %c0_6] : memref<32x96xbf16, #tpu.memory_space<vmem>>, vector<32x32xbf16>
    %cst = arith.constant dense<0.000000e+00> : vector<8x32xf32>
    %7 = tpu.matmul %2, %6, %cst {dimension_numbers = #tpu.dot_dimension_numbers<[1], [0], [0], [1], [0, 0, 1, 1], [], []>} : vector<8x32xbf16>, vector<32x32xbf16>, vector<8x32xf32> -> vector<8x32xf32>
    %c0_7 = arith.constant 0 : index
    %c0_8 = arith.constant 0 : index
    %8 = vector.load %arg7[%c0_7, %c0_8] : memref<1x288xf32, #tpu.memory_space<vmem>>, vector<1x32xf32>
    %9 = vector.broadcast %8 : vector<1x32xf32> to vector<8x32xf32>
    %10 = arith.addf %7, %9 : vector<8x32xf32>
    %c0_9 = arith.constant 0 : index
    %c32 = arith.constant 32 : index
    %11 = vector.load %arg3[%c0_9, %c32] : memref<32x96xbf16, #tpu.memory_space<vmem>>, vector<32x64xbf16>
    %cst_10 = arith.constant dense<0.000000e+00> : vector<16x64xf32>
    %12 = tpu.matmul %5, %11, %cst_10 {dimension_numbers = #tpu.dot_dimension_numbers<[1], [0], [0], [1], [0, 0, 1, 1], [], []>} : vector<16x32xbf16>, vector<32x64xbf16>, vector<16x64xf32> -> vector<16x64xf32>
    %c0_11 = arith.constant 0 : index
    %c32_12 = arith.constant 32 : index
    %13 = vector.load %arg7[%c0_11, %c32_12] : memref<1x288xf32, #tpu.memory_space<vmem>>, vector<1x64xf32>
    %14 = vector.broadcast %13 : vector<1x64xf32> to vector<16x64xf32>
    %15 = arith.addf %12, %14 : vector<16x64xf32>
    %16 = vector.extract_strided_slice %15 {offsets = [0, 0], sizes = [16, 32], strides = [1, 1]} : vector<16x64xf32> to vector<16x32xf32>
    %17 = vector.extract_strided_slice %15 {offsets = [0, 32], sizes = [16, 32], strides = [1, 1]} : vector<16x64xf32> to vector<16x32xf32>
    %18 = vector.shape_cast %10 : vector<8x32xf32> to vector<4x2x4x8xf32>
    %19 = tpu.transpose %18, [1, 2, 0, 3] : vector<4x2x4x8xf32> -> vector<2x4x4x8xf32>
    %20 = vector.shape_cast %19 : vector<2x4x4x8xf32> to vector<8x4x8xf32>
    %21 = vector.shape_cast %16 : vector<16x32xf32> to vector<8x2x4x8xf32>
    %22 = tpu.transpose %21, [1, 2, 0, 3] : vector<8x2x4x8xf32> -> vector<2x4x8x8xf32>
    %23 = vector.shape_cast %22 : vector<2x4x8x8xf32> to vector<8x8x8xf32>
    %24 = vector.shape_cast %17 : vector<16x32xf32> to vector<8x2x4x8xf32>
    %25 = tpu.transpose %24, [1, 2, 0, 3] : vector<8x2x4x8xf32> -> vector<2x4x8x8xf32>
    %26 = vector.shape_cast %25 : vector<2x4x8x8xf32> to vector<8x8x8xf32>
    %27 = arith.truncf %20 : vector<8x4x8xf32> to vector<8x4x8xbf16>
    %28 = arith.truncf %23 : vector<8x8x8xf32> to vector<8x8x8xbf16>
    %cst_13 = arith.constant dense<0.000000e+00> : vector<8x4x8xf32>
    %29 = tpu.matmul %27, %28, %cst_13 {dimension_numbers = #tpu.dot_dimension_numbers<[2], [2], [1], [1], [0, 0, 0, 1, 1, 1], [0], [0]>} : vector<8x4x8xbf16>, vector<8x8x8xbf16>, vector<8x4x8xf32> -> vector<8x4x8xf32>
    %cst_14 = arith.constant dense<0xFF800000> : vector<8x4xf32>
    %30 = vector.multi_reduction <maximumf>, %29, %cst_14 [2] : vector<8x4x8xf32> to vector<8x4xf32>
    %31 = vector.shape_cast %30 : vector<8x4xf32> to vector<8x4x1xf32>
    %32 = vector.broadcast %31 : vector<8x4x1xf32> to vector<8x4x8xf32>
    %33 = arith.subf %29, %32 : vector<8x4x8xf32>
    %34 = math.exp %33 : vector<8x4x8xf32>
    %cst_15 = arith.constant dense<0.000000e+00> : vector<8x4xf32>
    %35 = vector.multi_reduction <add>, %34, %cst_15 [2] : vector<8x4x8xf32> to vector<8x4xf32>
    %36 = vector.shape_cast %35 : vector<8x4xf32> to vector<8x4x1xf32>
    %37 = tpu.reciprocal %36 {approx = true} : vector<8x4x1xf32> -> vector<8x4x1xf32>
    %38 = vector.broadcast %37 : vector<8x4x1xf32> to vector<8x4x8xf32>
    %39 = arith.mulf %34, %38 : vector<8x4x8xf32>
    %40 = arith.truncf %39 : vector<8x4x8xf32> to vector<8x4x8xbf16>
    %41 = arith.truncf %26 : vector<8x8x8xf32> to vector<8x8x8xbf16>
    %cst_16 = arith.constant dense<0.000000e+00> : vector<8x4x8xf32>
    %42 = tpu.matmul %40, %41, %cst_16 {dimension_numbers = #tpu.dot_dimension_numbers<[2], [1], [1], [2], [0, 0, 0, 1, 1, 2], [0], [0]>} : vector<8x4x8xbf16>, vector<8x8x8xbf16>, vector<8x4x8xf32> -> vector<8x4x8xf32>
    %43 = vector.shape_cast %42 : vector<8x4x8xf32> to vector<2x4x4x8xf32>
    %44 = tpu.transpose %43, [2, 0, 1, 3] : vector<2x4x4x8xf32> -> vector<4x2x4x8xf32>
    %45 = vector.shape_cast %44 : vector<4x2x4x8xf32> to vector<8x32xf32>
    %46 = arith.truncf %45 : vector<8x32xf32> to vector<8x32xbf16>
    %c0_17 = arith.constant 0 : index
    %c0_18 = arith.constant 0 : index
    %47 = vector.load %arg4[%c0_17, %c0_18] : memref<32x32xbf16, #tpu.memory_space<vmem>>, vector<32x32xbf16>
    %cst_19 = arith.constant dense<0.000000e+00> : vector<8x32xf32>
    %48 = tpu.matmul %46, %47, %cst_19 {dimension_numbers = #tpu.dot_dimension_numbers<[1], [0], [0], [1], [0, 0, 1, 1], [], []>} : vector<8x32xbf16>, vector<32x32xbf16>, vector<8x32xf32> -> vector<8x32xf32>
    %c0_20 = arith.constant 0 : index
    %c96 = arith.constant 96 : index
    %49 = vector.load %arg7[%c0_20, %c96] : memref<1x288xf32, #tpu.memory_space<vmem>>, vector<1x32xf32>
    %50 = vector.broadcast %49 : vector<1x32xf32> to vector<8x32xf32>
    %51 = arith.addf %48, %50 : vector<8x32xf32>
    %52 = arith.truncf %51 : vector<8x32xf32> to vector<8x32xbf16>
    %c0_21 = arith.constant 0 : index
    %c0_22 = arith.constant 0 : index
    %53 = vector.load %arg5[%c0_21, %c0_22] : memref<32x128xbf16, #tpu.memory_space<vmem>>, vector<32x128xbf16>
    %cst_23 = arith.constant dense<0.000000e+00> : vector<8x128xf32>
    %54 = tpu.matmul %52, %53, %cst_23 {dimension_numbers = #tpu.dot_dimension_numbers<[1], [0], [0], [1], [0, 0, 1, 1], [], []>} : vector<8x32xbf16>, vector<32x128xbf16>, vector<8x128xf32> -> vector<8x128xf32>
    %c0_24 = arith.constant 0 : index
    %c128 = arith.constant 128 : index
    %55 = vector.load %arg7[%c0_24, %c128] : memref<1x288xf32, #tpu.memory_space<vmem>>, vector<1x128xf32>
    %56 = vector.broadcast %55 : vector<1x128xf32> to vector<8x128xf32>
    %57 = arith.addf %54, %56 : vector<8x128xf32>
    %cst_25 = arith.constant 0.000000e+00 : f32
    %58 = vector.broadcast %cst_25 : f32 to vector<8x128xf32>
    %59 = arith.maximumf %57, %58 : vector<8x128xf32>
    %60 = arith.truncf %59 : vector<8x128xf32> to vector<8x128xbf16>
    %c0_26 = arith.constant 0 : index
    %c0_27 = arith.constant 0 : index
    %61 = vector.load %arg6[%c0_26, %c0_27] : memref<128x32xbf16, #tpu.memory_space<vmem>>, vector<128x32xbf16>
    %cst_28 = arith.constant dense<0.000000e+00> : vector<8x32xf32>
    %62 = tpu.matmul %60, %61, %cst_28 {dimension_numbers = #tpu.dot_dimension_numbers<[1], [0], [0], [1], [0, 0, 1, 1], [], []>} : vector<8x128xbf16>, vector<128x32xbf16>, vector<8x32xf32> -> vector<8x32xf32>
    %c0_29 = arith.constant 0 : index
    %c256 = arith.constant 256 : index
    %63 = vector.load %arg7[%c0_29, %c256] : memref<1x288xf32, #tpu.memory_space<vmem>>, vector<1x32xf32>
    %64 = vector.broadcast %63 : vector<1x32xf32> to vector<8x32xf32>
    %65 = arith.addf %62, %64 : vector<8x32xf32>
    %66 = vector.shape_cast %65 : vector<8x32xf32> to vector<4x2x32xf32>
    %c0_30 = arith.constant 0 : index
    %c0_31 = arith.constant 0 : index
    %c0_32 = arith.constant 0 : index
    %67 = vector.load %arg8[%c0_30, %c0_31, %c0_32] : memref<4x2x32xf32, #tpu.memory_space<vmem>>, vector<4x2x32xf32>
    tpu.vector_store %arg8[%c0_30, %c0_31, %c0_32], %66 {strides = array<i32>} : memref<4x2x32xf32, #tpu.memory_space<vmem>>, vector<4x2x32xf32>,
    return
  }
  func.func @transform_0(%arg0: i32) -> (i32, i32, i32) {
    %c0_i32 = arith.constant 0 : i32
    %c0_i32_0 = arith.constant 0 : i32
    %c0_i32_1 = arith.constant 0 : i32
    return %arg0, %c0_i32, %c0_i32_0 : i32, i32, i32
  }
  func.func @transform_1(%arg0: i32) -> (i32, i32, i32) {
    %c0_i32 = arith.constant 0 : i32
    %c0_i32_0 = arith.constant 0 : i32
    %c0_i32_1 = arith.constant 0 : i32
    %c0_i32_2 = arith.constant 0 : i32
    return %c0_i32, %c0_i32_0, %c0_i32_1 : i32, i32, i32
  }
  func.func @transform_2(%arg0: i32) -> (i32, i32) {
    %c0_i32 = arith.constant 0 : i32
    %c0_i32_0 = arith.constant 0 : i32
    %c0_i32_1 = arith.constant 0 : i32
    return %c0_i32, %c0_i32_0 : i32, i32
  }
  func.func @transform_3(%arg0: i32) -> (i32, i32) {
    %c0_i32 = arith.constant 0 : i32
    %c0_i32_0 = arith.constant 0 : i32
    %c0_i32_1 = arith.constant 0 : i32
    return %c0_i32, %c0_i32_0 : i32, i32
  }
  func.func @transform_4(%arg0: i32) -> (i32, i32) {
    %c0_i32 = arith.constant 0 : i32
    %c0_i32_0 = arith.constant 0 : i32
    %c0_i32_1 = arith.constant 0 : i32
    return %c0_i32, %c0_i32_0 : i32, i32
  }
  func.func @transform_5(%arg0: i32) -> (i32, i32) {
    %c0_i32 = arith.constant 0 : i32
    %c0_i32_0 = arith.constant 0 : i32
    %c0_i32_1 = arith.constant 0 : i32
    return %c0_i32, %c0_i32_0 : i32, i32
  }
  func.func @transform_6(%arg0: i32) -> (i32, i32) {
    %c0_i32 = arith.constant 0 : i32
    %c0_i32_0 = arith.constant 0 : i32
    %c0_i32_1 = arith.constant 0 : i32
    return %c0_i32, %c0_i32_0 : i32, i32
  }
  func.func @transform_7(%arg0: i32) -> (i32, i32, i32) {
    %c0_i32 = arith.constant 0 : i32
    %c0_i32_0 = arith.constant 0 : i32
    %c0_i32_1 = arith.constant 0 : i32
    return %arg0, %c0_i32, %c0_i32_0 : i32, i32, i32
  }
}

</mosaic_0001>

<llo_original>
// kernel: tpu_custom_call.1
$region0: #{tpu_custom_call.1}
  #allocation0 [shape = 'u32[]', space=smem, size = 0x4, offset = 0x4, fixed_abs, tag = 'smem constant byte address 0x4 - core index']
  #allocation1 [shape = 'u32[144,128]{1,0:T(1,128)}', space=vmem, size = 0x12000, scoped, tag = 'internal scratch']
  %s0 = inlined_call_operand.vmem [shape: f32[8,2,32], index: 0, kind: input, shape index: {}]
  %s1 = inlined_call_operand.vmem [shape: f32[8,2,32], index: 1, kind: input, shape index: {}]
  %s2 = inlined_call_operand.vmem [shape: bf16[32,96], index: 2, kind: input, shape index: {}]
  %s3 = inlined_call_operand.vmem [shape: bf16[32,32], index: 3, kind: input, shape index: {}]
  %s4 = inlined_call_operand.vmem [shape: bf16[32,128], index: 4, kind: input, shape index: {}]
  %s5 = inlined_call_operand.vmem [shape: bf16[128,32], index: 5, kind: input, shape index: {}]
  %s6 = inlined_call_operand.vmem [shape: f32[1,288], index: 6, kind: input, shape index: {}]
  %s7 = inlined_call_operand.hbm [shape: f32[8,2,32], index: 7, kind: output, shape index: {}]
  %s8 = sld [smem:[#allocation0]]
  $region61: #{tpu_custom_call.1} parent=0
    _
  %s10 = ssub.s32 1, %s8
  %s11 = scalar_select 0, %s10, %s8
  $region1: #{tpu_custom_call.1} parent=0
    #allocation2 [shape = 'u8[8192]{0}', space=vmem, size = 0x2000, scoped, tag = 'output window, operand 0']
    #allocation3 [shape = 's32[2]{0}', space=sflag, size = 0x8, scoped, tag = 'scoped memory for tpu_custom_call.1']
    %12 = vsyncpa [#allocation3], 0
    %s13 = scalar_lea.sflag [#allocation3], 1
    %14 = vsyncpa %s13, 0
    loop: start=0, step=1, limit=4
    $region2: #{tpu_custom_call.1} parent=1 // loop_pre_header
      _
    $region3: #{tpu_custom_call.1} parent=1 // loop_header
      %s16 = sphi 0, %s20
      %p17 = scmp.ge.s32.totalorder %s16, 4
      %s26 = sphi 0, %s28
      %s29 = sphi 0, %s26
      %s30 = sphi 0, %s29
      %s46 = sphi 0, %s30
      %s50 = sphi 0, %s50
      %s52 = sphi 0, %s50
      %s53 = sphi 0, %s52
      %s67 = sphi 0, %s53
      %s71 = sphi 0, %s71
      %s73 = sphi 0, %s71
      %s74 = sphi 0, %s73
      %s88 = sphi 0, %s74
      %s92 = sphi 0, %s92
      %s94 = sphi 0, %s92
      %s95 = sphi 0, %s94
      %s109 = sphi 0, %s95
      %s113 = sphi 0, %s113
      %s115 = sphi 0, %s113
      %s116 = sphi 0, %s115
      %s130 = sphi 0, %s116
      %s134 = sphi 0, %s134
      %s136 = sphi 0, %s134
      %s137 = sphi 0, %s136
      %s151 = sphi 0, %s137
      %s155 = sphi 0, %s155
      %s157 = sphi 0, %s155
      %s158 = sphi 0, %s157
      %s172 = sphi 0, %s158
      %s178 = sphi 0, %s180
      %s181 = sphi 0, %s178
      %s182 = sphi 0, %s181
      %s198 = sphi 0, %s182
    $region4: #{tpu_custom_call.1} parent=1 // loop_header_branch
      %19 = sbr.rel (%p17) target = $region8
    $region5: #{tpu_custom_call.1} parent=1 // loop_body
      %s21 = ssub.s32 %s16, 1
      %s22 = ssub.s32 %s16, 2
      %s23 = sadd.s32 %s16, 1
      %s24 = ssub.s32 %s16, %s23
      %p25 = scmp.eq.s32.totalorder %s24, 0
      %s27 = sadd.s32 %s26, 1
      %s28 = scalar_select %p25, %s26, %s27
      %p31 = pneg %p25
      %p32 = scmp.eq.s32.totalorder %s16, 1
      %p33 = por %p31, %p32
      %p34 = scmp.ne.s32.totalorder %s26, %s29
      %p35 = scmp.eq.s32.totalorder %s16, 0
      %p36 = por %p34, %p35
      %p37 = scmp.ne.s32.totalorder %s26, %s29
      %p38 = scmp.eq.s32.totalorder %s21, 1
      %p39 = por %p37, %p38
      %p40 = scmp.ne.s32.totalorder %s29, %s30
      %p41 = scmp.eq.s32.totalorder %s21, 0
      %p42 = por %p40, %p41
      %p43 = scmp.ne.s32.totalorder %s29, %s30
      %p44 = scmp.eq.s32.totalorder %s22, 1
      %p45 = por %p43, %p44
      %p47 = scmp.ne.s32.totalorder %s30, %s46
      %p48 = scmp.eq.s32.totalorder %s22, 0
      %p49 = por %p47, %p48
      %s51 = sadd.s32 %s50, 1
      %p54 = scmp.eq.s32.totalorder %s16, 1
      %p55 = scmp.ne.s32.totalorder %s50, %s52
      %p56 = scmp.eq.s32.totalorder %s16, 0
      %p57 = por %p55, %p56
      %p58 = scmp.ne.s32.totalorder %s50, %s52
      %p59 = scmp.eq.s32.totalorder %s21, 1
      %p60 = por %p58, %p59
      %p61 = scmp.ne.s32.totalorder %s52, %s53
      %p62 = scmp.eq.s32.totalorder %s21, 0
      %p63 = por %p61, %p62
      %p64 = scmp.ne.s32.totalorder %s52, %s53
      %p65 = scmp.eq.s32.totalorder %s22, 1
      %p66 = por %p64, %p65
      %p68 = scmp.ne.s32.totalorder %s53, %s67
      %p69 = scmp.eq.s32.totalorder %s22, 0
      %p70 = por %p68, %p69
      %s72 = sadd.s32 %s71, 1
      %p75 = scmp.eq.s32.totalorder %s16, 1
      %p76 = scmp.ne.s32.totalorder %s71, %s73
      %p77 = scmp.eq.s32.totalorder %s16, 0
      %p78 = por %p76, %p77
      %p79 = scmp.ne.s32.totalorder %s71, %s73
      %p80 = scmp.eq.s32.totalorder %s21, 1
      %p81 = por %p79, %p80
      %p82 = scmp.ne.s32.totalorder %s73, %s74
      %p83 = scmp.eq.s32.totalorder %s21, 0
      %p84 = por %p82, %p83
      %p85 = scmp.ne.s32.totalorder %s73, %s74
      %p86 = scmp.eq.s32.totalorder %s22, 1
      %p87 = por %p85, %p86
      %p89 = scmp.ne.s32.totalorder %s74, %s88
      %p90 = scmp.eq.s32.totalorder %s22, 0
      %p91 = por %p89, %p90
      %s93 = sadd.s32 %s92, 1
      %p96 = scmp.eq.s32.totalorder %s16, 1
      %p97 = scmp.ne.s32.totalorder %s92, %s94
      %p98 = scmp.eq.s32.totalorder %s16, 0
      %p99 = por %p97, %p98
      %p100 = scmp.ne.s32.totalorder %s92, %s94
      %p101 = scmp.eq.s32.totalorder %s21, 1
      %p102 = por %p100, %p101
      %p103 = scmp.ne.s32.totalorder %s94, %s95
      %p104 = scmp.eq.s32.totalorder %s21, 0
      %p105 = por %p103, %p104
      %p106 = scmp.ne.s32.totalorder %s94, %s95
      %p107 = scmp.eq.s32.totalorder %s22, 1
      %p108 = por %p106, %p107
      %p110 = scmp.ne.s32.totalorder %s95, %s109
      %p111 = scmp.eq.s32.totalorder %s22, 0
      %p112 = por %p110, %p111
      %s114 = sadd.s32 %s113, 1
      %p117 = scmp.eq.s32.totalorder %s16, 1
      %p118 = scmp.ne.s32.totalorder %s113, %s115
      %p119 = scmp.eq.s32.totalorder %s16, 0
      %p120 = por %p118, %p119
      %p121 = scmp.ne.s32.totalorder %s113, %s115
      %p122 = scmp.eq.s32.totalorder %s21, 1
      %p123 = por %p121, %p122
      %p124 = scmp.ne.s32.totalorder %s115, %s116
      %p125 = scmp.eq.s32.totalorder %s21, 0
      %p126 = por %p124, %p125
      %p127 = scmp.ne.s32.totalorder %s115, %s116
      %p128 = scmp.eq.s32.totalorder %s22, 1
      %p129 = por %p127, %p128
      %p131 = scmp.ne.s32.totalorder %s116, %s130
      %p132 = scmp.eq.s32.totalorder %s22, 0
      %p133 = por %p131, %p132
      %s135 = sadd.s32 %s134, 1
      %p138 = scmp.eq.s32.totalorder %s16, 1
      %p139 = scmp.ne.s32.totalorder %s134, %s136
      %p140 = scmp.eq.s32.totalorder %s16, 0
      %p141 = por %p139, %p140
      %p142 = scmp.ne.s32.totalorder %s134, %s136
      %p143 = scmp.eq.s32.totalorder %s21, 1
      %p144 = por %p142, %p143
      %p145 = scmp.ne.s32.totalorder %s136, %s137
      %p146 = scmp.eq.s32.totalorder %s21, 0
      %p147 = por %p145, %p146
      %p148 = scmp.ne.s32.totalorder %s136, %s137
      %p149 = scmp.eq.s32.totalorder %s22, 1
      %p150 = por %p148, %p149
      %p152 = scmp.ne.s32.totalorder %s137, %s151
      %p153 = scmp.eq.s32.totalorder %s22, 0
      %p154 = por %p152, %p153
      %s156 = sadd.s32 %s155, 1
      %p159 = scmp.eq.s32.totalorder %s16, 1
      %p160 = scmp.ne.s32.totalorder %s155, %s157
      %p161 = scmp.eq.s32.totalorder %s16, 0
      %p162 = por %p160, %p161
      %p163 = scmp.ne.s32.totalorder %s155, %s157
      %p164 = scmp.eq.s32.totalorder %s21, 1
      %p165 = por %p163, %p164
      %p166 = scmp.ne.s32.totalorder %s157, %s158
      %p167 = scmp.eq.s32.totalorder %s21, 0
      %p168 = por %p166, %p167
      %p169 = scmp.ne.s32.totalorder %s157, %s158
      %p170 = scmp.eq.s32.totalorder %s22, 1
      %p171 = por %p169, %p170
      %p173 = scmp.ne.s32.totalorder %s158, %s172
      %p174 = scmp.eq.s32.totalorder %s22, 0
      %p175 = por %p173, %p174
      %s176 = ssub.s32 %s16, %s23
      %p177 = scmp.eq.s32.totalorder %s176, 0
      %s179 = sadd.s32 %s178, 1
      %s180 = scalar_select %p177, %s178, %s179
      %p183 = pneg %p177
      %p184 = scmp.eq.s32.totalorder %s16, 1
      %p185 = por %p183, %p184
      %p186 = scmp.ne.s32.totalorder %s178, %s181
      %p187 = scmp.eq.s32.totalorder %s16, 0
      %p188 = por %p186, %p187
      %p189 = scmp.ne.s32.totalorder %s178, %s181
      %p190 = scmp.eq.s32.totalorder %s21, 1
      %p191 = por %p189, %p190
      %p192 = scmp.ne.s32.totalorder %s181, %s182
      %p193 = scmp.eq.s32.totalorder %s21, 0
      %p194 = por %p192, %p193
      %p195 = scmp.ne.s32.totalorder %s181, %s182
      %p196 = scmp.eq.s32.totalorder %s22, 1
      %p197 = por %p195, %p196
      %p199 = scmp.ne.s32.totalorder %s182, %s198
      %p200 = scmp.eq.s32.totalorder %s22, 0
      %p201 = por %p199, %p200
      %p202 = scmp.le.s32.totalorder 1, %s16
      %p203 = scmp.lt.s32.totalorder %s16, 3
      %p204 = pnand %p202, %p203
      %p205 = pneg %p204
      // Predicated region
      $region9: #{tpu_custom_call.1} parent=5 // pred_check
        _
      $region10: #{tpu_custom_call.1} parent=5 // pred_check_branch
        %207 = sbr.rel (%p204) target = $region12
      $region11: #{tpu_custom_call.1} parent=5 // pred_region
        %s208 = ssub.s32 %s16, 1
        // Predicated region
        $region13: #{tpu_custom_call.1} parent=11 // pred_check
          %p209 = pneg %p63
        $region14: #{tpu_custom_call.1} parent=11 // pred_check_branch
          %211 = sbr.rel (%p209) target = $region16
        $region15: #{tpu_custom_call.1} parent=11 // pred_region
          _
        $region16: #{tpu_custom_call.1} parent=11 // pred_fallthru
          _
        // Predicated region
        $region17: #{tpu_custom_call.1} parent=11 // pred_check
          %p212 = pneg %p84
        $region18: #{tpu_custom_call.1} parent=11 // pred_check_branch
          %214 = sbr.rel (%p212) target = $region20
        $region19: #{tpu_custom_call.1} parent=11 // pred_region
          _
        $region20: #{tpu_custom_call.1} parent=11 // pred_fallthru
          _
        // Predicated region
        $region21: #{tpu_custom_call.1} parent=11 // pred_check
          %p215 = pneg %p105
        $region22: #{tpu_custom_call.1} parent=11 // pred_check_branch
          %217 = sbr.rel (%p215) target = $region24
        $region23: #{tpu_custom_call.1} parent=11 // pred_region
          _
        $region24: #{tpu_custom_call.1} parent=11 // pred_fallthru
          _
        // Predicated region
        $region25: #{tpu_custom_call.1} parent=11 // pred_check
          %p218 = pneg %p126
        $region26: #{tpu_custom_call.1} parent=11 // pred_check_branch
          %220 = sbr.rel (%p218) target = $region28
        $region27: #{tpu_custom_call.1} parent=11 // pred_region
          _
        $region28: #{tpu_custom_call.1} parent=11 // pred_fallthru
          _
        // Predicated region
        $region29: #{tpu_custom_call.1} parent=11 // pred_check
          %p221 = pneg %p147
        $region30: #{tpu_custom_call.1} parent=11 // pred_check_branch
          %223 = sbr.rel (%p221) target = $region32
        $region31: #{tpu_custom_call.1} parent=11 // pred_region
          _
        $region32: #{tpu_custom_call.1} parent=11 // pred_fallthru
          _
        // Predicated region
        $region33: #{tpu_custom_call.1} parent=11 // pred_check
          %p224 = pneg %p168
        $region34: #{tpu_custom_call.1} parent=11 // pred_check_branch
          %226 = sbr.rel (%p224) target = $region36
        $region35: #{tpu_custom_call.1} parent=11 // pred_region
          _
        $region36: #{tpu_custom_call.1} parent=11 // pred_fallthru
          _
      $region12: #{tpu_custom_call.1} parent=5 // pred_fallthru
        _
      %p227 = scmp.lt.s32.totalorder %s16, 2
      // Predicated region
      $region37: #{tpu_custom_call.1} parent=5 // pred_check
        %p228 = pneg %p227
      $region38: #{tpu_custom_call.1} parent=5 // pred_check_branch
        %230 = sbr.rel (%p228) target = $region40
      $region39: #{tpu_custom_call.1} parent=5 // pred_region
        // Predicated region
        $region41: #{tpu_custom_call.1} parent=39 // pred_check
          %p231 = pneg %p36
        $region42: #{tpu_custom_call.1} parent=39 // pred_check_branch
          %233 = sbr.rel (%p231) target = $region44
        $region43: #{tpu_custom_call.1} parent=39 // pred_region
          %s234 = smul.u32 4, %s16
          %p235 = scmp.lt.s32.totalorder %s234, 7
          %s236 = scalar_select %p235, %s234, 7
          %s237 = smul.addr %s236, 2
          %s238 = scalar_lea.vmem %s0, %s237
          %s239 = smul.u32 4, %s16
        $region44: #{tpu_custom_call.1} parent=39 // pred_fallthru
          _
      $region40: #{tpu_custom_call.1} parent=5 // pred_fallthru
        _
      %p240 = scmp.le.s32.totalorder 1, %s16
      %p241 = scmp.lt.s32.totalorder %s16, 3
      %p242 = pnand %p240, %p241
      %p243 = pneg %p242
      // Predicated region
      $region45: #{tpu_custom_call.1} parent=5 // pred_check
        _
      $region46: #{tpu_custom_call.1} parent=5 // pred_check_branch
        %245 = sbr.rel (%p242) target = $region48
      $region47: #{tpu_custom_call.1} parent=5 // pred_region
        %s246 = ssub.s32 %s16, 1
        %s247 = smul.u32 4, %s21
        %p248 = scmp.lt.s32.totalorder %s247, 7
        %s249 = scalar_select %p248, %s247, 7
        %s250 = smul.addr %s249, 2
        %s251 = scalar_lea.vmem %s0, %s250
        %p252 = pneg %p42
        %p253 = pneg %p39
        %p254 = pneg %p63
        %p255 = pneg %p60
        %p256 = pneg %p84
        %p257 = pneg %p81
        %p258 = pneg %p105
        %p259 = pneg %p102
        %p260 = pneg %p126
        %p261 = pneg %p123
        %p262 = pneg %p147
        %p263 = pneg %p144
        %p264 = pneg %p168
        %p265 = pneg %p165
        %p266 = pneg %p194
        %p267 = pneg %p191
        %s268 = sand.u32 %s181, 1
        %s269 = scalar_lea.sflag [#allocation3], %s268
        %s270 = sand.u32 %s181, 1
        %s271 = smul.addr %s270, 8
        %s272 = scalar_lea.vmem [#allocation2], %s271
        %s273 = smul.u32 4, %s21
        %p274 = scmp.lt.s32.totalorder %s273, 7
        %s275 = scalar_select %p274, %s273, 7
        %s276 = smul.addr %s275, 2
        %s277 = scalar_lea.vmem %s0, %s276
        %s278 = smul.u32 4, %s21
        %s279 = smul.u32 4, %s21
        %v281 = vld [vmem:[%s277] sm:$0x3]
        %v282 = vld [vmem:[%s277 + $0x2] sm:$0x3]
        %v283 = vld [vmem:[%s277 + $0x4] sm:$0x3]
        %v284 = vld [vmem:[%s277 + $0x6] sm:$0x3]
        %v289 = vcombine.low %v281, %v282
        %v290 = vcombine.low %v283, %v284
        %v292 = vunpack.c.l.s4 1983009808
        %v293 = vunpack.c.0.s8 %v292
        %v294 = vlaneseq
        %v295 = vshrl.u32 %v294, 7
        %v296 = vsub.s32 %v293, %v295
        %v297 = vrot.slane %v289, %v296
        %v299 = vunpack.c.l.s4 1983009808
        %v300 = vunpack.c.0.s8 %v299
        %v301 = vlaneseq
        %v302 = vshrl.u32 %v301, 7
        %v303 = vsub.s32 %v300, %v302
        %v304 = vrot.slane %v290, %v303
        %v305 = vcombine.low %v297, %v304
        %v307 = vpack.c.bf16 %v305, %v305
        %v308 = vld [vmem:[%s1] sm:$0x3]
        %v309 = vld [vmem:[%s1 + $0x2] sm:$0x3]
        %v310 = vld [vmem:[%s1 + $0x4] sm:$0x3]
        %v311 = vld [vmem:[%s1 + $0x6] sm:$0x3]
        %v312 = vld [vmem:[%s1 + $0x8] sm:$0x3]
        %v313 = vld [vmem:[%s1 + $0xa] sm:$0x3]
        %v314 = vld [vmem:[%s1 + $0xc] sm:$0x3]
        %v315 = vld [vmem:[%s1 + $0xe] sm:$0x3]
        %v324 = vcombine.low %v308, %v309
        %v325 = vcombine.low %v310, %v311
        %v327 = vunpack.c.l.s4 1983009808
        %v328 = vunpack.c.0.s8 %v327
        %v329 = vlaneseq
        %v330 = vshrl.u32 %v329, 7
        %v331 = vsub.s32 %v328, %v330
        %v332 = vrot.slane %v324, %v331
        %v334 = vunpack.c.l.s4 1983009808
        %v335 = vunpack.c.0.s8 %v334
        %v336 = vlaneseq
        %v337 = vshrl.u32 %v336, 7
        %v338 = vsub.s32 %v335, %v337
        %v339 = vrot.slane %v325, %v338
        %v340 = vcombine.low %v332, %v339
        %v341 = vcombine.low %v312, %v313
        %v342 = vcombine.low %v314, %v315
        %v344 = vunpack.c.l.s4 1983009808
        %v345 = vunpack.c.0.s8 %v344
        %v346 = vlaneseq
        %v347 = vshrl.u32 %v346, 7
        %v348 = vsub.s32 %v345, %v347
        %v349 = vrot.slane %v341, %v348
        %v351 = vunpack.c.l.s4 1983009808
        %v352 = vunpack.c.0.s8 %v351
        %v353 = vlaneseq
        %v354 = vshrl.u32 %v353, 7
        %v355 = vsub.s32 %v352, %v354
        %v356 = vrot.slane %v342, %v355
        %v357 = vcombine.low %v349, %v356
        %v360 = vpack.c.bf16 %v357, %v340
        %v361 = vld [vmem:[%s2] sm:$0xf]
        %v362 = vld [vmem:[%s2 + $0x4] sm:$0xf]
        %v363 = vld [vmem:[%s2 + $0x8] sm:$0xf]
        %v364 = vld [vmem:[%s2 + $0xc] sm:$0xf]
        %v365 = vld [vmem:[%s6] sm:$0x1]
        %v367 = vlaneseq
        %v368 = vshrl.u32 %v367, 7
        %v369 = vsub.s32 0, %v368
        %v370 = vrot.slane %v365, %v369
        %v376 = vunpack.c.l.b16 %v361
        %v377 = vunpack.c.l.b16 %v362
        %v378 = vunpack.c.l.b16 %v363
        %v379 = vunpack.c.l.b16 %v364
        %v380 = vpack.c.b16 %v377, %v376
        %v381 = vpack.c.b16 %v379, %v378
        %vm384 = vcmask 261120
        %v386 = vsel %vm384, %v307, 0
        %388 = vmatprep.subr.bf16.mxu0 0
        %389 = vmatpush1.bf16.msra.mxu0 %v380
        %390 = vmatprep.subr.bf16.mxu0 0
        %391 = vmatpush1.bf16.msra.mxu0 %v381
        %392 = vmatprep.subr.bf16.mxu0 0
        %393 = vmatpush1.bf16.msra.mxu0 0
        %394 = vmatprep.subr.bf16.mxu0 0
        %395 = vmatpush1.bf16.msra.mxu0 0
        %396 = vmatprep.subr.bf16.mxu0 0
        %397 = vmatpush1.bf16.msra.mxu0 0
        %398 = vmatprep.subr.bf16.mxu0 0
        %399 = vmatpush1.bf16.msra.mxu0 0
        %400 = vmatprep.subr.bf16.mxu0 0
        %401 = vmatpush1.bf16.msra.mxu0 0
        %402 = vmatprep.subr.bf16.mxu0 0
        %403 = vmatpush1.bf16.msra.mxu0 0
        %404 = vmatprep.subr.bf16.mxu0 0
        %405 = vmatpush1.bf16.msra.mxu0 0
        %406 = vmatprep.subr.bf16.mxu0 0
        %407 = vmatpush1.bf16.msra.mxu0 0
        %408 = vmatprep.subr.bf16.mxu0 0
        %409 = vmatpush1.bf16.msra.mxu0 0
        %410 = vmatprep.subr.bf16.mxu0 0
        %411 = vmatpush1.bf16.msra.mxu0 0
        %412 = vmatprep.subr.bf16.mxu0 0
        %413 = vmatpush1.bf16.msra.mxu0 0
        %414 = vmatprep.subr.bf16.mxu0 0
        %415 = vmatpush1.bf16.msra.mxu0 0
        %416 = vmatprep.subr.bf16.mxu0 0
        %417 = vmatpush1.bf16.msra.mxu0 0
        %418 = vmatprep.subr.bf16.mxu0 0
        %419 = vmatpush1.bf16.msra.mxu0 0
        %420 = vmatprep.mubr.bf16.mxu0 0
        %421 = vmatmul.mubr.bf16.gmra.mrb[0].mxu0 %v386
        %v422 = vpop.f32.mrb[0].mxu0
        %v423 = vadd.f32 %v370, %v422
        %v424 = vpop.f32.mrb[0].mxu0
        %v425 = vpop.f32.mrb[0].mxu0
        %v426 = vpop.f32.mrb[0].mxu0
        %427 = vdwg.mxu0
        %428 = vrot.lane.b32.xlu0 %v380, 96
        %v429 = vpop.permute.xlu0 %428
        %430 = vrot.lane.b32.xlu0 %v381, 96
        %v431 = vpop.permute.xlu0 %430
        %434 = vrot.lane.b32.xlu0 %v370, 96
        %v435 = vpop.permute.xlu0 %434
        %v438 = vsel %vm384, %v360, 0
        %440 = vmatprep.subr.bf16.mxu0 0
        %441 = vmatpush1.bf16.msra.mxu0 %v429
        %442 = vmatprep.subr.bf16.mxu0 0
        %443 = vmatpush1.bf16.msra.mxu0 %v431
        %444 = vmatprep.subr.bf16.mxu0 0
        %445 = vmatpush1.bf16.msra.mxu0 0
        %446 = vmatprep.subr.bf16.mxu0 0
        %447 = vmatpush1.bf16.msra.mxu0 0
        %448 = vmatprep.subr.bf16.mxu0 0
        %449 = vmatpush1.bf16.msra.mxu0 0
        %450 = vmatprep.subr.bf16.mxu0 0
        %451 = vmatpush1.bf16.msra.mxu0 0
        %452 = vmatprep.subr.bf16.mxu0 0
        %453 = vmatpush1.bf16.msra.mxu0 0
        %454 = vmatprep.subr.bf16.mxu0 0
        %455 = vmatpush1.bf16.msra.mxu0 0
        %456 = vmatprep.subr.bf16.mxu0 0
        %457 = vmatpush1.bf16.msra.mxu0 0
        %458 = vmatprep.subr.bf16.mxu0 0
        %459 = vmatpush1.bf16.msra.mxu0 0
        %460 = vmatprep.subr.bf16.mxu0 0
        %461 = vmatpush1.bf16.msra.mxu0 0
        %462 = vmatprep.subr.bf16.mxu0 0
        %463 = vmatpush1.bf16.msra.mxu0 0
        %464 = vmatprep.subr.bf16.mxu0 0
        %465 = vmatpush1.bf16.msra.mxu0 0
        %466 = vmatprep.subr.bf16.mxu0 0
        %467 = vmatpush1.bf16.msra.mxu0 0
        %468 = vmatprep.subr.bf16.mxu0 0
        %469 = vmatpush1.bf16.msra.mxu0 0
        %470 = vmatprep.subr.bf16.mxu0 0
        %471 = vmatpush1.bf16.msra.mxu0 0
        %472 = vmatprep.mubr.bf16.mxu0 0
        %473 = vmatmul.mubr.bf16.gmra.mrb[0].mxu0 %v438
        %v474 = vpop.f32.mrb[0].mxu0
        %v475 = vadd.f32 %v435, %v474
        %v476 = vpop.f32.mrb[0].mxu0
        %v477 = vpop.f32.mrb[0].mxu0
        %v478 = vadd.f32 %v435, %v477
        %v479 = vpop.f32.mrb[0].mxu0
        %480 = vdwg.mxu0
        %482 = vrot.lane.b32.xlu0 %v423, 120
        %v483 = vpop.permute.xlu0 %482
        %485 = vrot.lane.b32.xlu0 %v423, 112
        %v486 = vpop.permute.xlu0 %485
        %488 = vrot.lane.b32.xlu0 %v423, 104
        %v489 = vpop.permute.xlu0 %488
        %v491 = vcombine.low %v423, %v486
        %v492 = vcombine.high %v423, %v486
        %v494 = vunpack.c.l.s4 1983009808
        %v495 = vunpack.c.0.s8 %v494
        %v496 = vlaneseq
        %v497 = vshrl.u32 %v496, 7
        %v498 = vsub.s32 %v495, %v497
        %v499 = vrot.slane %v491, %v498
        %v501 = vunpack.c.l.s4 1983009808
        %v502 = vunpack.c.0.s8 %v501
        %v503 = vlaneseq
        %v504 = vshrl.u32 %v503, 7
        %v505 = vsub.s32 %v502, %v504
        %v506 = vrot.slane %v492, %v505
        %v507 = vcombine.low %v483, %v489
        %v508 = vcombine.high %v483, %v489
        %v510 = vunpack.c.l.s4 1983009808
        %v511 = vunpack.c.0.s8 %v510
        %v512 = vlaneseq
        %v513 = vshrl.u32 %v512, 7
        %v514 = vsub.s32 %v511, %v513
        %v515 = vrot.slane %v507, %v514
        %v517 = vunpack.c.l.s4 1983009808
        %v518 = vunpack.c.0.s8 %v517
        %v519 = vlaneseq
        %v520 = vshrl.u32 %v519, 7
        %v521 = vsub.s32 %v518, %v520
        %v522 = vrot.slane %v508, %v521
        %v523 = vcombine.low %v499, %v515
        %v524 = vcombine.high %v499, %v515
        %v526 = vunpack.c.l.s4 1934713408
        %v527 = vunpack.c.0.s8 %v526
        %v528 = vlaneseq
        %v529 = vshrl.u32 %v528, 7
        %v530 = vsub.s32 %v527, %v529
        %v531 = vrot.slane %v523, %v530
        %v533 = vunpack.c.l.s4 1934713408
        %v534 = vunpack.c.0.s8 %v533
        %v535 = vlaneseq
        %v536 = vshrl.u32 %v535, 7
        %v537 = vsub.s32 %v534, %v536
        %v538 = vrot.slane %v524, %v537
        %v539 = vcombine.low %v506, %v522
        %v540 = vcombine.high %v506, %v522
        %v542 = vunpack.c.l.s4 1934713408
        %v543 = vunpack.c.0.s8 %v542
        %v544 = vlaneseq
        %v545 = vshrl.u32 %v544, 7
        %v546 = vsub.s32 %v543, %v545
        %v547 = vrot.slane %v539, %v546
        %v549 = vunpack.c.l.s4 1934713408
        %v550 = vunpack.c.0.s8 %v549
        %v551 = vlaneseq
        %v552 = vshrl.u32 %v551, 7
        %v553 = vsub.s32 %v550, %v552
        %v554 = vrot.slane %v540, %v553
        %v555 = vcombine.high %v531, 0.0
        %v556 = vcombine.high %v538, 0.0
        %v557 = vcombine.high %v547, 0.0
        %v558 = vcombine.high %v554, 0.0
        %v559 = vcombine.low %v531, %v547
        %v561 = vunpack.c.l.s4 1983009808
        %v562 = vunpack.c.0.s8 %v561
        %v563 = vlaneseq
        %v564 = vshrl.u32 %v563, 7
        %v565 = vsub.s32 %v562, %v564
        %v566 = vrot.slane %v559, %v565
        %v567 = vcombine.low %v538, %v554
        %v569 = vunpack.c.l.s4 1983009808
        %v570 = vunpack.c.0.s8 %v569
        %v571 = vlaneseq
        %v572 = vshrl.u32 %v571, 7
        %v573 = vsub.s32 %v570, %v572
        %v574 = vrot.slane %v567, %v573
        %v575 = vcombine.low %v566, %v574
        %v576 = vcombine.high %v566, %v574
        %v578 = vunpack.c.l.s4 1934713408
        %v579 = vunpack.c.0.s8 %v578
        %v580 = vlaneseq
        %v581 = vshrl.u32 %v580, 7
        %v582 = vsub.s32 %v579, %v581
        %v583 = vrot.slane %v575, %v582
        %v585 = vunpack.c.l.s4 1934713408
        %v586 = vunpack.c.0.s8 %v585
        %v587 = vlaneseq
        %v588 = vshrl.u32 %v587, 7
        %v589 = vsub.s32 %v586, %v588
        %v590 = vrot.slane %v576, %v589
        %v591 = vcombine.high %v583, 0.0
        %v592 = vcombine.high %v590, 0.0
        %v593 = vcombine.low %v555, %v557
        %v595 = vunpack.c.l.s4 1983009808
        %v596 = vunpack.c.0.s8 %v595
        %v597 = vlaneseq
        %v598 = vshrl.u32 %v597, 7
        %v599 = vsub.s32 %v596, %v598
        %v600 = vrot.slane %v593, %v599
        %v601 = vcombine.low %v556, %v558
        %v603 = vunpack.c.l.s4 1983009808
        %v604 = vunpack.c.0.s8 %v603
        %v605 = vlaneseq
        %v606 = vshrl.u32 %v605, 7
        %v607 = vsub.s32 %v604, %v606
        %v608 = vrot.slane %v601, %v607
        %v609 = vcombine.low %v600, %v608
        %v610 = vcombine.high %v600, %v608
        %v612 = vunpack.c.l.s4 1934713408
        %v613 = vunpack.c.0.s8 %v612
        %v614 = vlaneseq
        %v615 = vshrl.u32 %v614, 7
        %v616 = vsub.s32 %v613, %v615
        %v617 = vrot.slane %v609, %v616
        %v619 = vunpack.c.l.s4 1934713408
        %v620 = vunpack.c.0.s8 %v619
        %v621 = vlaneseq
        %v622 = vshrl.u32 %v621, 7
        %v623 = vsub.s32 %v620, %v622
        %v624 = vrot.slane %v610, %v623
        %v625 = vcombine.high %v617, 0.0
        %v626 = vcombine.high %v624, 0.0
        %629 = vrot.lane.b32.xlu0 %v475, 120
        %v630 = vpop.permute.xlu0 %629
        %631 = vrot.lane.b32.xlu0 %v478, 120
        %v632 = vpop.permute.xlu0 %631
        %635 = vrot.lane.b32.xlu0 %v475, 112
        %v636 = vpop.permute.xlu0 %635
        %637 = vrot.lane.b32.xlu0 %v478, 112
        %v638 = vpop.permute.xlu0 %637
        %641 = vrot.lane.b32.xlu0 %v475, 104
        %v642 = vpop.permute.xlu0 %641
        %643 = vrot.lane.b32.xlu0 %v478, 104
        %v644 = vpop.permute.xlu0 %643
        %v647 = vcombine.low %v475, %v636
        %v648 = vcombine.high %v475, %v636
        %v650 = vunpack.c.l.s4 1983009808
        %v651 = vunpack.c.0.s8 %v650
        %v652 = vlaneseq
        %v653 = vshrl.u32 %v652, 7
        %v654 = vsub.s32 %v651, %v653
        %v655 = vrot.slane %v647, %v654
        %v657 = vunpack.c.l.s4 1983009808
        %v658 = vunpack.c.0.s8 %v657
        %v659 = vlaneseq
        %v660 = vshrl.u32 %v659, 7
        %v661 = vsub.s32 %v658, %v660
        %v662 = vrot.slane %v648, %v661
        %v663 = vcombine.low %v630, %v642
        %v664 = vcombine.high %v630, %v642
        %v666 = vunpack.c.l.s4 1983009808
        %v667 = vunpack.c.0.s8 %v666
        %v668 = vlaneseq
        %v669 = vshrl.u32 %v668, 7
        %v670 = vsub.s32 %v667, %v669
        %v671 = vrot.slane %v663, %v670
        %v673 = vunpack.c.l.s4 1983009808
        %v674 = vunpack.c.0.s8 %v673
        %v675 = vlaneseq
        %v676 = vshrl.u32 %v675, 7
        %v677 = vsub.s32 %v674, %v676
        %v678 = vrot.slane %v664, %v677
        %v679 = vcombine.low %v655, %v671
        %v680 = vcombine.high %v655, %v671
        %v682 = vunpack.c.l.s4 1934713408
        %v683 = vunpack.c.0.s8 %v682
        %v684 = vlaneseq
        %v685 = vshrl.u32 %v684, 7
        %v686 = vsub.s32 %v683, %v685
        %v687 = vrot.slane %v679, %v686
        %v689 = vunpack.c.l.s4 1934713408
        %v690 = vunpack.c.0.s8 %v689
        %v691 = vlaneseq
        %v692 = vshrl.u32 %v691, 7
        %v693 = vsub.s32 %v690, %v692
        %v694 = vrot.slane %v680, %v693
        %v695 = vcombine.low %v662, %v678
        %v696 = vcombine.high %v662, %v678
        %v698 = vunpack.c.l.s4 1934713408
        %v699 = vunpack.c.0.s8 %v698
        %v700 = vlaneseq
        %v701 = vshrl.u32 %v700, 7
        %v702 = vsub.s32 %v699, %v701
        %v703 = vrot.slane %v695, %v702
        %v705 = vunpack.c.l.s4 1934713408
        %v706 = vunpack.c.0.s8 %v705
        %v707 = vlaneseq
        %v708 = vshrl.u32 %v707, 7
        %v709 = vsub.s32 %v706, %v708
        %v710 = vrot.slane %v696, %v709
        %v711 = vcombine.high %v687, 0.0
        %v712 = vcombine.high %v694, 0.0
        %v713 = vcombine.high %v703, 0.0
        %v714 = vcombine.high %v710, 0.0
        %v715 = vcombine.low %v478, %v638
        %v716 = vcombine.high %v478, %v638
        %v718 = vunpack.c.l.s4 1983009808
        %v719 = vunpack.c.0.s8 %v718
        %v720 = vlaneseq
        %v721 = vshrl.u32 %v720, 7
        %v722 = vsub.s32 %v719, %v721
        %v723 = vrot.slane %v715, %v722
        %v725 = vunpack.c.l.s4 1983009808
        %v726 = vunpack.c.0.s8 %v725
        %v727 = vlaneseq
        %v728 = vshrl.u32 %v727, 7
        %v729 = vsub.s32 %v726, %v728
        %v730 = vrot.slane %v716, %v729
        %v731 = vcombine.low %v632, %v644
        %v732 = vcombine.high %v632, %v644
        %v734 = vunpack.c.l.s4 1983009808
        %v735 = vunpack.c.0.s8 %v734
        %v736 = vlaneseq
        %v737 = vshrl.u32 %v736, 7
        %v738 = vsub.s32 %v735, %v737
        %v739 = vrot.slane %v731, %v738
        %v741 = vunpack.c.l.s4 1983009808
        %v742 = vunpack.c.0.s8 %v741
        %v743 = vlaneseq
        %v744 = vshrl.u32 %v743, 7
        %v745 = vsub.s32 %v742, %v744
        %v746 = vrot.slane %v732, %v745
        %v747 = vcombine.low %v723, %v739
        %v748 = vcombine.high %v723, %v739
        %v750 = vunpack.c.l.s4 1934713408
        %v751 = vunpack.c.0.s8 %v750
        %v752 = vlaneseq
        %v753 = vshrl.u32 %v752, 7
        %v754 = vsub.s32 %v751, %v753
        %v755 = vrot.slane %v747, %v754
        %v757 = vunpack.c.l.s4 1934713408
        %v758 = vunpack.c.0.s8 %v757
        %v759 = vlaneseq
        %v760 = vshrl.u32 %v759, 7
        %v761 = vsub.s32 %v758, %v760
        %v762 = vrot.slane %v748, %v761
        %v763 = vcombine.low %v730, %v746
        %v764 = vcombine.high %v730, %v746
        %v766 = vunpack.c.l.s4 1934713408
        %v767 = vunpack.c.0.s8 %v766
        %v768 = vlaneseq
        %v769 = vshrl.u32 %v768, 7
        %v770 = vsub.s32 %v767, %v769
        %v771 = vrot.slane %v763, %v770
        %v773 = vunpack.c.l.s4 1934713408
        %v774 = vunpack.c.0.s8 %v773
        %v775 = vlaneseq
        %v776 = vshrl.u32 %v775, 7
        %v777 = vsub.s32 %v774, %v776
        %v778 = vrot.slane %v764, %v777
        %v779 = vcombine.high %v755, 0.0
        %v780 = vcombine.high %v762, 0.0
        %v781 = vcombine.high %v771, 0.0
        %v782 = vcombine.high %v778, 0.0
        %v783 = vcombine.low %v687, %v703
        %v785 = vunpack.c.l.s4 1983009808
        %v786 = vunpack.c.0.s8 %v785
        %v787 = vlaneseq
        %v788 = vshrl.u32 %v787, 7
        %v789 = vsub.s32 %v786, %v788
        %v790 = vrot.slane %v783, %v789
        %v791 = vcombine.low %v694, %v710
        %v793 = vunpack.c.l.s4 1983009808
        %v794 = vunpack.c.0.s8 %v793
        %v795 = vlaneseq
        %v796 = vshrl.u32 %v795, 7
        %v797 = vsub.s32 %v794, %v796
        %v798 = vrot.slane %v791, %v797
        %v799 = vcombine.low %v755, %v771
        %v801 = vunpack.c.l.s4 1983009808
        %v802 = vunpack.c.0.s8 %v801
        %v803 = vlaneseq
        %v804 = vshrl.u32 %v803, 7
        %v805 = vsub.s32 %v802, %v804
        %v806 = vrot.slane %v799, %v805
        %v807 = vcombine.low %v762, %v778
        %v809 = vunpack.c.l.s4 1983009808
        %v810 = vunpack.c.0.s8 %v809
        %v811 = vlaneseq
        %v812 = vshrl.u32 %v811, 7
        %v813 = vsub.s32 %v810, %v812
        %v814 = vrot.slane %v807, %v813
        %v815 = vcombine.low %v790, %v798
        %v816 = vcombine.high %v790, %v798
        %v818 = vunpack.c.l.s4 1934713408
        %v819 = vunpack.c.0.s8 %v818
        %v820 = vlaneseq
        %v821 = vshrl.u32 %v820, 7
        %v822 = vsub.s32 %v819, %v821
        %v823 = vrot.slane %v815, %v822
        %v825 = vunpack.c.l.s4 1934713408
        %v826 = vunpack.c.0.s8 %v825
        %v827 = vlaneseq
        %v828 = vshrl.u32 %v827, 7
        %v829 = vsub.s32 %v826, %v828
        %v830 = vrot.slane %v816, %v829
        %v831 = vcombine.low %v806, %v814
        %v832 = vcombine.high %v806, %v814
        %v834 = vunpack.c.l.s4 1934713408
        %v835 = vunpack.c.0.s8 %v834
        %v836 = vlaneseq
        %v837 = vshrl.u32 %v836, 7
        %v838 = vsub.s32 %v835, %v837
        %v839 = vrot.slane %v831, %v838
        %v841 = vunpack.c.l.s4 1934713408
        %v842 = vunpack.c.0.s8 %v841
        %v843 = vlaneseq
        %v844 = vshrl.u32 %v843, 7
        %v845 = vsub.s32 %v842, %v844
        %v846 = vrot.slane %v832, %v845
        %v847 = vcombine.low %v823, %v839
        %v848 = vcombine.high %v823, %v839
        %v849 = vcombine.low %v830, %v846
        %v850 = vcombine.high %v830, %v846
        %v851 = vcombine.low %v711, %v713
        %v853 = vunpack.c.l.s4 1983009808
        %v854 = vunpack.c.0.s8 %v853
        %v855 = vlaneseq
        %v856 = vshrl.u32 %v855, 7
        %v857 = vsub.s32 %v854, %v856
        %v858 = vrot.slane %v851, %v857
        %v859 = vcombine.low %v712, %v714
        %v861 = vunpack.c.l.s4 1983009808
        %v862 = vunpack.c.0.s8 %v861
        %v863 = vlaneseq
        %v864 = vshrl.u32 %v863, 7
        %v865 = vsub.s32 %v862, %v864
        %v866 = vrot.slane %v859, %v865
        %v867 = vcombine.low %v779, %v781
        %v869 = vunpack.c.l.s4 1983009808
        %v870 = vunpack.c.0.s8 %v869
        %v871 = vlaneseq
        %v872 = vshrl.u32 %v871, 7
        %v873 = vsub.s32 %v870, %v872
        %v874 = vrot.slane %v867, %v873
        %v875 = vcombine.low %v780, %v782
        %v877 = vunpack.c.l.s4 1983009808
        %v878 = vunpack.c.0.s8 %v877
        %v879 = vlaneseq
        %v880 = vshrl.u32 %v879, 7
        %v881 = vsub.s32 %v878, %v880
        %v882 = vrot.slane %v875, %v881
        %v883 = vcombine.low %v858, %v866
        %v884 = vcombine.high %v858, %v866
        %v886 = vunpack.c.l.s4 1934713408
        %v887 = vunpack.c.0.s8 %v886
        %v888 = vlaneseq
        %v889 = vshrl.u32 %v888, 7
        %v890 = vsub.s32 %v887, %v889
        %v891 = vrot.slane %v883, %v890
        %v893 = vunpack.c.l.s4 1934713408
        %v894 = vunpack.c.0.s8 %v893
        %v895 = vlaneseq
        %v896 = vshrl.u32 %v895, 7
        %v897 = vsub.s32 %v894, %v896
        %v898 = vrot.slane %v884, %v897
        %v899 = vcombine.low %v874, %v882
        %v900 = vcombine.high %v874, %v882
        %v902 = vunpack.c.l.s4 1934713408
        %v903 = vunpack.c.0.s8 %v902
        %v904 = vlaneseq
        %v905 = vshrl.u32 %v904, 7
        %v906 = vsub.s32 %v903, %v905
        %v907 = vrot.slane %v899, %v906
        %v909 = vunpack.c.l.s4 1934713408
        %v910 = vunpack.c.0.s8 %v909
        %v911 = vlaneseq
        %v912 = vshrl.u32 %v911, 7
        %v913 = vsub.s32 %v910, %v912
        %v914 = vrot.slane %v900, %v913
        %v915 = vcombine.low %v891, %v907
        %v916 = vcombine.high %v891, %v907
        %v917 = vcombine.low %v898, %v914
        %v918 = vcombine.high %v898, %v914
        %919 = vrot.lane.b32.xlu0 %v475, 96
        %v920 = vpop.permute.xlu0 %919
        %921 = vrot.lane.b32.xlu0 %v478, 96
        %v922 = vpop.permute.xlu0 %921
        %923 = vrot.lane.b32.xlu0 %v630, 96
        %v924 = vpop.permute.xlu0 %923
        %925 = vrot.lane.b32.xlu0 %v632, 96
        %v926 = vpop.permute.xlu0 %925
        %927 = vrot.lane.b32.xlu0 %v636, 96
        %v928 = vpop.permute.xlu0 %927
        %929 = vrot.lane.b32.xlu0 %v638, 96
        %v930 = vpop.permute.xlu0 %929
        %931 = vrot.lane.b32.xlu0 %v642, 96
        %v932 = vpop.permute.xlu0 %931
        %933 = vrot.lane.b32.xlu0 %v644, 96
        %v934 = vpop.permute.xlu0 %933
        %v943 = vcombine.low %v920, %v928
        %v944 = vcombine.high %v920, %v928
        %v946 = vunpack.c.l.s4 1983009808
        %v947 = vunpack.c.0.s8 %v946
        %v948 = vlaneseq
        %v949 = vshrl.u32 %v948, 7
        %v950 = vsub.s32 %v947, %v949
        %v951 = vrot.slane %v943, %v950
        %v953 = vunpack.c.l.s4 1983009808
        %v954 = vunpack.c.0.s8 %v953
        %v955 = vlaneseq
        %v956 = vshrl.u32 %v955, 7
        %v957 = vsub.s32 %v954, %v956
        %v958 = vrot.slane %v944, %v957
        %v959 = vcombine.low %v924, %v932
        %v960 = vcombine.high %v924, %v932
        %v962 = vunpack.c.l.s4 1983009808
        %v963 = vunpack.c.0.s8 %v962
        %v964 = vlaneseq
        %v965 = vshrl.u32 %v964, 7
        %v966 = vsub.s32 %v963, %v965
        %v967 = vrot.slane %v959, %v966
        %v969 = vunpack.c.l.s4 1983009808
        %v970 = vunpack.c.0.s8 %v969
        %v971 = vlaneseq
        %v972 = vshrl.u32 %v971, 7
        %v973 = vsub.s32 %v970, %v972
        %v974 = vrot.slane %v960, %v973
        %v975 = vcombine.low %v951, %v967
        %v976 = vcombine.high %v951, %v967
        %v978 = vunpack.c.l.s4 1934713408
        %v979 = vunpack.c.0.s8 %v978
        %v980 = vlaneseq
        %v981 = vshrl.u32 %v980, 7
        %v982 = vsub.s32 %v979, %v981
        %v983 = vrot.slane %v975, %v982
        %v985 = vunpack.c.l.s4 1934713408
        %v986 = vunpack.c.0.s8 %v985
        %v987 = vlaneseq
        %v988 = vshrl.u32 %v987, 7
        %v989 = vsub.s32 %v986, %v988
        %v990 = vrot.slane %v976, %v989
        %v991 = vcombine.low %v958, %v974
        %v992 = vcombine.high %v958, %v974
        %v994 = vunpack.c.l.s4 1934713408
        %v995 = vunpack.c.0.s8 %v994
        %v996 = vlaneseq
        %v997 = vshrl.u32 %v996, 7
        %v998 = vsub.s32 %v995, %v997
        %v999 = vrot.slane %v991, %v998
        %v1001 = vunpack.c.l.s4 1934713408
        %v1002 = vunpack.c.0.s8 %v1001
        %v1003 = vlaneseq
        %v1004 = vshrl.u32 %v1003, 7
        %v1005 = vsub.s32 %v1002, %v1004
        %v1006 = vrot.slane %v992, %v1005
        %v1007 = vcombine.high %v983, 0.0
        %v1008 = vcombine.high %v990, 0.0
        %v1009 = vcombine.high %v999, 0.0
        %v1010 = vcombine.high %v1006, 0.0
        %v1011 = vcombine.low %v922, %v930
        %v1012 = vcombine.high %v922, %v930
        %v1014 = vunpack.c.l.s4 1983009808
        %v1015 = vunpack.c.0.s8 %v1014
        %v1016 = vlaneseq
        %v1017 = vshrl.u32 %v1016, 7
        %v1018 = vsub.s32 %v1015, %v1017
        %v1019 = vrot.slane %v1011, %v1018
        %v1021 = vunpack.c.l.s4 1983009808
        %v1022 = vunpack.c.0.s8 %v1021
        %v1023 = vlaneseq
        %v1024 = vshrl.u32 %v1023, 7
        %v1025 = vsub.s32 %v1022, %v1024
        %v1026 = vrot.slane %v1012, %v1025
        %v1027 = vcombine.low %v926, %v934
        %v1028 = vcombine.high %v926, %v934
        %v1030 = vunpack.c.l.s4 1983009808
        %v1031 = vunpack.c.0.s8 %v1030
        %v1032 = vlaneseq
        %v1033 = vshrl.u32 %v1032, 7
        %v1034 = vsub.s32 %v1031, %v1033
        %v1035 = vrot.slane %v1027, %v1034
        %v1037 = vunpack.c.l.s4 1983009808
        %v1038 = vunpack.c.0.s8 %v1037
        %v1039 = vlaneseq
        %v1040 = vshrl.u32 %v1039, 7
        %v1041 = vsub.s32 %v1038, %v1040
        %v1042 = vrot.slane %v1028, %v1041
        %v1043 = vcombine.low %v1019, %v1035
        %v1044 = vcombine.high %v1019, %v1035
        %v1046 = vunpack.c.l.s4 1934713408
        %v1047 = vunpack.c.0.s8 %v1046
        %v1048 = vlaneseq
        %v1049 = vshrl.u32 %v1048, 7
        %v1050 = vsub.s32 %v1047, %v1049
        %v1051 = vrot.slane %v1043, %v1050
        %v1053 = vunpack.c.l.s4 1934713408
        %v1054 = vunpack.c.0.s8 %v1053
        %v1055 = vlaneseq
        %v1056 = vshrl.u32 %v1055, 7
        %v1057 = vsub.s32 %v1054, %v1056
        %v1058 = vrot.slane %v1044, %v1057
        %v1059 = vcombine.low %v1026, %v1042
        %v1060 = vcombine.high %v1026, %v1042
        %v1062 = vunpack.c.l.s4 1934713408
        %v1063 = vunpack.c.0.s8 %v1062
        %v1064 = vlaneseq
        %v1065 = vshrl.u32 %v1064, 7
        %v1066 = vsub.s32 %v1063, %v1065
        %v1067 = vrot.slane %v1059, %v1066
        %v1069 = vunpack.c.l.s4 1934713408
        %v1070 = vunpack.c.0.s8 %v1069
        %v1071 = vlaneseq
        %v1072 = vshrl.u32 %v1071, 7
        %v1073 = vsub.s32 %v1070, %v1072
        %v1074 = vrot.slane %v1060, %v1073
        %v1075 = vcombine.high %v1051, 0.0
        %v1076 = vcombine.high %v1058, 0.0
        %v1077 = vcombine.high %v1067, 0.0
        %v1078 = vcombine.high %v1074, 0.0
        %v1079 = vcombine.low %v983, %v999
        %v1081 = vunpack.c.l.s4 1983009808
        %v1082 = vunpack.c.0.s8 %v1081
        %v1083 = vlaneseq
        %v1084 = vshrl.u32 %v1083, 7
        %v1085 = vsub.s32 %v1082, %v1084
        %v1086 = vrot.slane %v1079, %v1085
        %v1087 = vcombine.low %v990, %v1006
        %v1089 = vunpack.c.l.s4 1983009808
        %v1090 = vunpack.c.0.s8 %v1089
        %v1091 = vlaneseq
        %v1092 = vshrl.u32 %v1091, 7
        %v1093 = vsub.s32 %v1090, %v1092
        %v1094 = vrot.slane %v1087, %v1093
        %v1095 = vcombine.low %v1051, %v1067
        %v1097 = vunpack.c.l.s4 1983009808
        %v1098 = vunpack.c.0.s8 %v1097
        %v1099 = vlaneseq
        %v1100 = vshrl.u32 %v1099, 7
        %v1101 = vsub.s32 %v1098, %v1100
        %v1102 = vrot.slane %v1095, %v1101
        %v1103 = vcombine.low %v1058, %v1074
        %v1105 = vunpack.c.l.s4 1983009808
        %v1106 = vunpack.c.0.s8 %v1105
        %v1107 = vlaneseq
        %v1108 = vshrl.u32 %v1107, 7
        %v1109 = vsub.s32 %v1106, %v1108
        %v1110 = vrot.slane %v1103, %v1109
        %v1111 = vcombine.low %v1086, %v1094
        %v1112 = vcombine.high %v1086, %v1094
        %v1114 = vunpack.c.l.s4 1934713408
        %v1115 = vunpack.c.0.s8 %v1114
        %v1116 = vlaneseq
        %v1117 = vshrl.u32 %v1116, 7
        %v1118 = vsub.s32 %v1115, %v1117
        %v1119 = vrot.slane %v1111, %v1118
        %v1121 = vunpack.c.l.s4 1934713408
        %v1122 = vunpack.c.0.s8 %v1121
        %v1123 = vlaneseq
        %v1124 = vshrl.u32 %v1123, 7
        %v1125 = vsub.s32 %v1122, %v1124
        %v1126 = vrot.slane %v1112, %v1125
        %v1127 = vcombine.low %v1102, %v1110
        %v1128 = vcombine.high %v1102, %v1110
        %v1130 = vunpack.c.l.s4 1934713408
        %v1131 = vunpack.c.0.s8 %v1130
        %v1132 = vlaneseq
        %v1133 = vshrl.u32 %v1132, 7
        %v1134 = vsub.s32 %v1131, %v1133
        %v1135 = vrot.slane %v1127, %v1134
        %v1137 = vunpack.c.l.s4 1934713408
        %v1138 = vunpack.c.0.s8 %v1137
        %v1139 = vlaneseq
        %v1140 = vshrl.u32 %v1139, 7
        %v1141 = vsub.s32 %v1138, %v1140
        %v1142 = vrot.slane %v1128, %v1141
        %v1143 = vcombine.low %v1119, %v1135
        %v1144 = vcombine.high %v1119, %v1135
        %v1145 = vcombine.low %v1126, %v1142
        %v1146 = vcombine.high %v1126, %v1142
        %v1147 = vcombine.low %v1007, %v1009
        %v1149 = vunpack.c.l.s4 1983009808
        %v1150 = vunpack.c.0.s8 %v1149
        %v1151 = vlaneseq
        %v1152 = vshrl.u32 %v1151, 7
        %v1153 = vsub.s32 %v1150, %v1152
        %v1154 = vrot.slane %v1147, %v1153
        %v1155 = vcombine.low %v1008, %v1010
        %v1157 = vunpack.c.l.s4 1983009808
        %v1158 = vunpack.c.0.s8 %v1157
        %v1159 = vlaneseq
        %v1160 = vshrl.u32 %v1159, 7
        %v1161 = vsub.s32 %v1158, %v1160
        %v1162 = vrot.slane %v1155, %v1161
        %v1163 = vcombine.low %v1075, %v1077
        %v1165 = vunpack.c.l.s4 1983009808
        %v1166 = vunpack.c.0.s8 %v1165
        %v1167 = vlaneseq
        %v1168 = vshrl.u32 %v1167, 7
        %v1169 = vsub.s32 %v1166, %v1168
        %v1170 = vrot.slane %v1163, %v1169
        %v1171 = vcombine.low %v1076, %v1078
        %v1173 = vunpack.c.l.s4 1983009808
        %v1174 = vunpack.c.0.s8 %v1173
        %v1175 = vlaneseq
        %v1176 = vshrl.u32 %v1175, 7
        %v1177 = vsub.s32 %v1174, %v1176
        %v1178 = vrot.slane %v1171, %v1177
        %v1179 = vcombine.low %v1154, %v1162
        %v1180 = vcombine.high %v1154, %v1162
        %v1182 = vunpack.c.l.s4 1934713408
        %v1183 = vunpack.c.0.s8 %v1182
        %v1184 = vlaneseq
        %v1185 = vshrl.u32 %v1184, 7
        %v1186 = vsub.s32 %v1183, %v1185
        %v1187 = vrot.slane %v1179, %v1186
        %v1189 = vunpack.c.l.s4 1934713408
        %v1190 = vunpack.c.0.s8 %v1189
        %v1191 = vlaneseq
        %v1192 = vshrl.u32 %v1191, 7
        %v1193 = vsub.s32 %v1190, %v1192
        %v1194 = vrot.slane %v1180, %v1193
        %v1195 = vcombine.low %v1170, %v1178
        %v1196 = vcombine.high %v1170, %v1178
        %v1198 = vunpack.c.l.s4 1934713408
        %v1199 = vunpack.c.0.s8 %v1198
        %v1200 = vlaneseq
        %v1201 = vshrl.u32 %v1200, 7
        %v1202 = vsub.s32 %v1199, %v1201
        %v1203 = vrot.slane %v1195, %v1202
        %v1205 = vunpack.c.l.s4 1934713408
        %v1206 = vunpack.c.0.s8 %v1205
        %v1207 = vlaneseq
        %v1208 = vshrl.u32 %v1207, 7
        %v1209 = vsub.s32 %v1206, %v1208
        %v1210 = vrot.slane %v1196, %v1209
        %v1211 = vcombine.low %v1187, %v1203
        %v1212 = vcombine.high %v1187, %v1203
        %v1213 = vcombine.low %v1194, %v1210
        %v1214 = vcombine.high %v1194, %v1210
        %v1215 = vpack.c.bf16 %v583, %v583
        %v1216 = vpack.c.bf16 %v591, %v591
        %v1217 = vpack.c.bf16 %v590, %v590
        %v1218 = vpack.c.bf16 %v592, %v592
        %v1219 = vpack.c.bf16 %v617, %v617
        %v1220 = vpack.c.bf16 %v625, %v625
        %v1221 = vpack.c.bf16 %v624, %v624
        %v1222 = vpack.c.bf16 %v626, %v626
        %v1223 = vpack.c.bf16 %v847, %v847
        %v1224 = vpack.c.bf16 %v848, %v848
        %v1225 = vpack.c.bf16 %v849, %v849
        %v1226 = vpack.c.bf16 %v850, %v850
        %v1227 = vpack.c.bf16 %v915, %v915
        %v1228 = vpack.c.bf16 %v916, %v916
        %v1229 = vpack.c.bf16 %v917, %v917
        %v1230 = vpack.c.bf16 %v918, %v918
        %vm1231 = vcmask 64512
        %v1233 = vsel %vm1231, %v1215, 0
        %v1236 = vsel %vm1231, %v1223, 0
        %1238 = vmatprep.subr.bf16.mxu0 0
        %1239 = vmatpush1.bf16.xpose.msra.mxu0 %v1236
        %1240 = vmatprep.subr.bf16.mxu0 0
        %1241 = vmatpush1.bf16.xpose.msra.mxu0 0
        %1242 = vmatprep.subr.bf16.mxu0 0
        %1243 = vmatpush1.bf16.xpose.msra.mxu0 0
        %1244 = vmatprep.subr.bf16.mxu0 0
        %1245 = vmatpush1.bf16.xpose.msra.mxu0 0
        %1246 = vmatprep.subr.bf16.mxu0 0
        %1247 = vmatpush1.bf16.xpose.msra.mxu0 0
        %1248 = vmatprep.subr.bf16.mxu0 0
        %1249 = vmatpush1.bf16.xpose.msra.mxu0 0
        %1250 = vmatprep.subr.bf16.mxu0 0
        %1251 = vmatpush1.bf16.xpose.msra.mxu0 0
        %1252 = vmatprep.subr.bf16.mxu0 0
        %1253 = vmatpush1.bf16.xpose.msra.mxu0 0
        %1254 = vmatprep.subr.bf16.mxu0 0
        %1255 = vmatpush1.bf16.xpose.msra.mxu0 0
        %1256 = vmatprep.subr.bf16.mxu0 0
        %1257 = vmatpush1.bf16.xpose.msra.mxu0 0
        %1258 = vmatprep.subr.bf16.mxu0 0
        %1259 = vmatpush1.bf16.xpose.msra.mxu0 0
        %1260 = vmatprep.subr.bf16.mxu0 0
        %1261 = vmatpush1.bf16.xpose.msra.mxu0 0
        %1262 = vmatprep.subr.bf16.mxu0 0
        %1263 = vmatpush1.bf16.xpose.msra.mxu0 0
        %1264 = vmatprep.subr.bf16.mxu0 0
        %1265 = vmatpush1.bf16.xpose.msra.mxu0 0
        %1266 = vmatprep.subr.bf16.mxu0 0
        %1267 = vmatpush1.bf16.xpose.msra.mxu0 0
        %1268 = vmatprep.subr.bf16.mxu0 0
        %1269 = vmatpush1.bf16.xpose.msra.mxu0 0
        %1270 = vmatprep.mubr.bf16.mxu0 0
        %1271 = vmatmul.mubr.bf16.gmra.mrb[0].mxu0 %v1233
        %v1272 = vpop.f32.mrb[0].mxu0
        %v1273 = vadd.f32 0.0, %v1272
        %v1274 = vpop.f32.mrb[0].mxu0
        %v1275 = vpop.f32.mrb[0].mxu0
        %v1276 = vpop.f32.mrb[0].mxu0
        %1277 = vdwg.mxu0
        %v1279 = vsel %vm1231, %v1216, 0
        %v1282 = vsel %vm1231, %v1224, 0
        %1284 = vmatprep.subr.bf16.mxu0 0
        %1285 = vmatpush1.bf16.xpose.msra.mxu0 %v1282
        %1286 = vmatprep.subr.bf16.mxu0 0
        %1287 = vmatpush1.bf16.xpose.msra.mxu0 0
        %1288 = vmatprep.subr.bf16.mxu0 0
        %1289 = vmatpush1.bf16.xpose.msra.mxu0 0
        %1290 = vmatprep.subr.bf16.mxu0 0
        %1291 = vmatpush1.bf16.xpose.msra.mxu0 0
        %1292 = vmatprep.subr.bf16.mxu0 0
        %1293 = vmatpush1.bf16.xpose.msra.mxu0 0
        %1294 = vmatprep.subr.bf16.mxu0 0
        %1295 = vmatpush1.bf16.xpose.msra.mxu0 0
        %1296 = vmatprep.subr.bf16.mxu0 0
        %1297 = vmatpush1.bf16.xpose.msra.mxu0 0
        %1298 = vmatprep.subr.bf16.mxu0 0
        %1299 = vmatpush1.bf16.xpose.msra.mxu0 0
        %1300 = vmatprep.subr.bf16.mxu0 0
        %1301 = vmatpush1.bf16.xpose.msra.mxu0 0
        %1302 = vmatprep.subr.bf16.mxu0 0
        %1303 = vmatpush1.bf16.xpose.msra.mxu0 0
        %1304 = vmatprep.subr.bf16.mxu0 0
        %1305 = vmatpush1.bf16.xpose.msra.mxu0 0
        %1306 = vmatprep.subr.bf16.mxu0 0
        %1307 = vmatpush1.bf16.xpose.msra.mxu0 0
        %1308 = vmatprep.subr.bf16.mxu0 0
        %1309 = vmatpush1.bf16.xpose.msra.mxu0 0
        %1310 = vmatprep.subr.bf16.mxu0 0
        %1311 = vmatpush1.bf16.xpose.msra.mxu0 0
        %1312 = vmatprep.subr.bf16.mxu0 0
        %1313 = vmatpush1.bf16.xpose.msra.mxu0 0
        %1314 = vmatprep.subr.bf16.mxu0 0
        %1315 = vmatpush1.bf16.xpose.msra.mxu0 0
        %1316 = vmatprep.mubr.bf16.mxu0 0
        %1317 = vmatmul.mubr.bf16.gmra.mrb[0].mxu0 %v1279
        %v1318 = vpop.f32.mrb[0].mxu0
        %v1319 = vadd.f32 0.0, %v1318
        %v1320 = vpop.f32.mrb[0].mxu0
        %v1321 = vpop.f32.mrb[0].mxu0
        %v1322 = vpop.f32.mrb[0].mxu0
        %1323 = vdwg.mxu0
        %v1325 = vsel %vm1231, %v1217, 0
        %v1328 = vsel %vm1231, %v1225, 0
        %1330 = vmatprep.subr.bf16.mxu0 0
        %1331 = vmatpush1.bf16.xpose.msra.mxu0 %v1328
        %1332 = vmatprep.subr.bf16.mxu0 0
        %1333 = vmatpush1.bf16.xpose.msra.mxu0 0
        %1334 = vmatprep.subr.bf16.mxu0 0
        %1335 = vmatpush1.bf16.xpose.msra.mxu0 0
        %1336 = vmatprep.subr.bf16.mxu0 0
        %1337 = vmatpush1.bf16.xpose.msra.mxu0 0
        %1338 = vmatprep.subr.bf16.mxu0 0
        %1339 = vmatpush1.bf16.xpose.msra.mxu0 0
        %1340 = vmatprep.subr.bf16.mxu0 0
        %1341 = vmatpush1.bf16.xpose.msra.mxu0 0
        %1342 = vmatprep.subr.bf16.mxu0 0
        %1343 = vmatpush1.bf16.xpose.msra.mxu0 0
        %1344 = vmatprep.subr.bf16.mxu0 0
        %1345 = vmatpush1.bf16.xpose.msra.mxu0 0
        %1346 = vmatprep.subr.bf16.mxu0 0
        %1347 = vmatpush1.bf16.xpose.msra.mxu0 0
        %1348 = vmatprep.subr.bf16.mxu0 0
        %1349 = vmatpush1.bf16.xpose.msra.mxu0 0
        %1350 = vmatprep.subr.bf16.mxu0 0
        %1351 = vmatpush1.bf16.xpose.msra.mxu0 0
        %1352 = vmatprep.subr.bf16.mxu0 0
        %1353 = vmatpush1.bf16.xpose.msra.mxu0 0
        %1354 = vmatprep.subr.bf16.mxu0 0
        %1355 = vmatpush1.bf16.xpose.msra.mxu0 0
        %1356 = vmatprep.subr.bf16.mxu0 0
        %1357 = vmatpush1.bf16.xpose.msra.mxu0 0
        %1358 = vmatprep.subr.bf16.mxu0 0
        %1359 = vmatpush1.bf16.xpose.msra.mxu0 0
        %1360 = vmatprep.subr.bf16.mxu0 0
        %1361 = vmatpush1.bf16.xpose.msra.mxu0 0
        %1362 = vmatprep.mubr.bf16.mxu0 0
        %1363 = vmatmul.mubr.bf16.gmra.mrb[0].mxu0 %v1325
        %v1364 = vpop.f32.mrb[0].mxu0
        %v1365 = vadd.f32 0.0, %v1364
        %v1366 = vpop.f32.mrb[0].mxu0
        %v1367 = vpop.f32.mrb[0].mxu0
        %v1368 = vpop.f32.mrb[0].mxu0
        %1369 = vdwg.mxu0
        %v1371 = vsel %vm1231, %v1218, 0
        %v1374 = vsel %vm1231, %v1226, 0
        %1376 = vmatprep.subr.bf16.mxu0 0
        %1377 = vmatpush1.bf16.xpose.msra.mxu0 %v1374
        %1378 = vmatprep.subr.bf16.mxu0 0
        %1379 = vmatpush1.bf16.xpose.msra.mxu0 0
        %1380 = vmatprep.subr.bf16.mxu0 0
        %1381 = vmatpush1.bf16.xpose.msra.mxu0 0
        %1382 = vmatprep.subr.bf16.mxu0 0
        %1383 = vmatpush1.bf16.xpose.msra.mxu0 0
        %1384 = vmatprep.subr.bf16.mxu0 0
        %1385 = vmatpush1.bf16.xpose.msra.mxu0 0
        %1386 = vmatprep.subr.bf16.mxu0 0
        %1387 = vmatpush1.bf16.xpose.msra.mxu0 0
        %1388 = vmatprep.subr.bf16.mxu0 0
        %1389 = vmatpush1.bf16.xpose.msra.mxu0 0
        %1390 = vmatprep.subr.bf16.mxu0 0
        %1391 = vmatpush1.bf16.xpose.msra.mxu0 0
        %1392 = vmatprep.subr.bf16.mxu0 0
        %1393 = vmatpush1.bf16.xpose.msra.mxu0 0
        %1394 = vmatprep.subr.bf16.mxu0 0
        %1395 = vmatpush1.bf16.xpose.msra.mxu0 0
        %1396 = vmatprep.subr.bf16.mxu0 0
        %1397 = vmatpush1.bf16.xpose.msra.mxu0 0
        %1398 = vmatprep.subr.bf16.mxu0 0
        %1399 = vmatpush1.bf16.xpose.msra.mxu0 0
        %1400 = vmatprep.subr.bf16.mxu0 0
        %1401 = vmatpush1.bf16.xpose.msra.mxu0 0
        %1402 = vmatprep.subr.bf16.mxu0 0
        %1403 = vmatpush1.bf16.xpose.msra.mxu0 0
        %1404 = vmatprep.subr.bf16.mxu0 0
        %1405 = vmatpush1.bf16.xpose.msra.mxu0 0
        %1406 = vmatprep.subr.bf16.mxu0 0
        %1407 = vmatpush1.bf16.xpose.msra.mxu0 0
        %1408 = vmatprep.mubr.bf16.mxu0 0
        %1409 = vmatmul.mubr.bf16.gmra.mrb[0].mxu0 %v1371
        %v1410 = vpop.f32.mrb[0].mxu0
        %v1411 = vadd.f32 0.0, %v1410
        %v1412 = vpop.f32.mrb[0].mxu0
        %v1413 = vpop.f32.mrb[0].mxu0
        %v1414 = vpop.f32.mrb[0].mxu0
        %1415 = vdwg.mxu0
        %v1417 = vsel %vm1231, %v1219, 0
        %v1420 = vsel %vm1231, %v1227, 0
        %1422 = vmatprep.subr.bf16.mxu0 0
        %1423 = vmatpush1.bf16.xpose.msra.mxu0 %v1420
        %1424 = vmatprep.subr.bf16.mxu0 0
        %1425 = vmatpush1.bf16.xpose.msra.mxu0 0
        %1426 = vmatprep.subr.bf16.mxu0 0
        %1427 = vmatpush1.bf16.xpose.msra.mxu0 0
        %1428 = vmatprep.subr.bf16.mxu0 0
        %1429 = vmatpush1.bf16.xpose.msra.mxu0 0
        %1430 = vmatprep.subr.bf16.mxu0 0
        %1431 = vmatpush1.bf16.xpose.msra.mxu0 0
        %1432 = vmatprep.subr.bf16.mxu0 0
        %1433 = vmatpush1.bf16.xpose.msra.mxu0 0
        %1434 = vmatprep.subr.bf16.mxu0 0
        %1435 = vmatpush1.bf16.xpose.msra.mxu0 0
        %1436 = vmatprep.subr.bf16.mxu0 0
        %1437 = vmatpush1.bf16.xpose.msra.mxu0 0
        %1438 = vmatprep.subr.bf16.mxu0 0
        %1439 = vmatpush1.bf16.xpose.msra.mxu0 0
        %1440 = vmatprep.subr.bf16.mxu0 0
        %1441 = vmatpush1.bf16.xpose.msra.mxu0 0
        %1442 = vmatprep.subr.bf16.mxu0 0
        %1443 = vmatpush1.bf16.xpose.msra.mxu0 0
        %1444 = vmatprep.subr.bf16.mxu0 0
        %1445 = vmatpush1.bf16.xpose.msra.mxu0 0
        %1446 = vmatprep.subr.bf16.mxu0 0
        %1447 = vmatpush1.bf16.xpose.msra.mxu0 0
        %1448 = vmatprep.subr.bf16.mxu0 0
        %1449 = vmatpush1.bf16.xpose.msra.mxu0 0
        %1450 = vmatprep.subr.bf16.mxu0 0
        %1451 = vmatpush1.bf16.xpose.msra.mxu0 0
        %1452 = vmatprep.subr.bf16.mxu0 0
        %1453 = vmatpush1.bf16.xpose.msra.mxu0 0
        %1454 = vmatprep.mubr.bf16.mxu0 0
        %1455 = vmatmul.mubr.bf16.gmra.mrb[0].mxu0 %v1417
        %v1456 = vpop.f32.mrb[0].mxu0
        %v1457 = vadd.f32 0.0, %v1456
        %v1458 = vpop.f32.mrb[0].mxu0
        %v1459 = vpop.f32.mrb[0].mxu0
        %v1460 = vpop.f32.mrb[0].mxu0
        %1461 = vdwg.mxu0
        %v1463 = vsel %vm1231, %v1220, 0
        %v1466 = vsel %vm1231, %v1228, 0
        %1468 = vmatprep.subr.bf16.mxu0 0
        %1469 = vmatpush1.bf16.xpose.msra.mxu0 %v1466
        %1470 = vmatprep.subr.bf16.mxu0 0
        %1471 = vmatpush1.bf16.xpose.msra.mxu0 0
        %1472 = vmatprep.subr.bf16.mxu0 0
        %1473 = vmatpush1.bf16.xpose.msra.mxu0 0
        %1474 = vmatprep.subr.bf16.mxu0 0
        %1475 = vmatpush1.bf16.xpose.msra.mxu0 0
        %1476 = vmatprep.subr.bf16.mxu0 0
        %1477 = vmatpush1.bf16.xpose.msra.mxu0 0
        %1478 = vmatprep.subr.bf16.mxu0 0
        %1479 = vmatpush1.bf16.xpose.msra.mxu0 0
        %1480 = vmatprep.subr.bf16.mxu0 0
        %1481 = vmatpush1.bf16.xpose.msra.mxu0 0
        %1482 = vmatprep.subr.bf16.mxu0 0
        %1483 = vmatpush1.bf16.xpose.msra.mxu0 0
        %1484 = vmatprep.subr.bf16.mxu0 0
        %1485 = vmatpush1.bf16.xpose.msra.mxu0 0
        %1486 = vmatprep.subr.bf16.mxu0 0
        %1487 = vmatpush1.bf16.xpose.msra.mxu0 0
        %1488 = vmatprep.subr.bf16.mxu0 0
        %1489 = vmatpush1.bf16.xpose.msra.mxu0 0
        %1490 = vmatprep.subr.bf16.mxu0 0
        %1491 = vmatpush1.bf16.xpose.msra.mxu0 0
        %1492 = vmatprep.subr.bf16.mxu0 0
        %1493 = vmatpush1.bf16.xpose.msra.mxu0 0
        %1494 = vmatprep.subr.bf16.mxu0 0
        %1495 = vmatpush1.bf16.xpose.msra.mxu0 0
        %1496 = vmatprep.subr.bf16.mxu0 0
        %1497 = vmatpush1.bf16.xpose.msra.mxu0 0
        %1498 = vmatprep.subr.bf16.mxu0 0
        %1499 = vmatpush1.bf16.xpose.msra.mxu0 0
        %1500 = vmatprep.mubr.bf16.mxu0 0
        %1501 = vmatmul.mubr.bf16.gmra.mrb[0].mxu0 %v1463
        %v1502 = vpop.f32.mrb[0].mxu0
        %v1503 = vadd.f32 0.0, %v1502
        %v1504 = vpop.f32.mrb[0].mxu0
        %v1505 = vpop.f32.mrb[0].mxu0
        %v1506 = vpop.f32.mrb[0].mxu0
        %1507 = vdwg.mxu0
        %v1509 = vsel %vm1231, %v1221, 0
        %v1512 = vsel %vm1231, %v1229, 0
        %1514 = vmatprep.subr.bf16.mxu0 0
        %1515 = vmatpush1.bf16.xpose.msra.mxu0 %v1512
        %1516 = vmatprep.subr.bf16.mxu0 0
        %1517 = vmatpush1.bf16.xpose.msra.mxu0 0
        %1518 = vmatprep.subr.bf16.mxu0 0
        %1519 = vmatpush1.bf16.xpose.msra.mxu0 0
        %1520 = vmatprep.subr.bf16.mxu0 0
        %1521 = vmatpush1.bf16.xpose.msra.mxu0 0
        %1522 = vmatprep.subr.bf16.mxu0 0
        %1523 = vmatpush1.bf16.xpose.msra.mxu0 0
        %1524 = vmatprep.subr.bf16.mxu0 0
        %1525 = vmatpush1.bf16.xpose.msra.mxu0 0
        %1526 = vmatprep.subr.bf16.mxu0 0
        %1527 = vmatpush1.bf16.xpose.msra.mxu0 0
        %1528 = vmatprep.subr.bf16.mxu0 0
        %1529 = vmatpush1.bf16.xpose.msra.mxu0 0
        %1530 = vmatprep.subr.bf16.mxu0 0
        %1531 = vmatpush1.bf16.xpose.msra.mxu0 0
        %1532 = vmatprep.subr.bf16.mxu0 0
        %1533 = vmatpush1.bf16.xpose.msra.mxu0 0
        %1534 = vmatprep.subr.bf16.mxu0 0
        %1535 = vmatpush1.bf16.xpose.msra.mxu0 0
        %1536 = vmatprep.subr.bf16.mxu0 0
        %1537 = vmatpush1.bf16.xpose.msra.mxu0 0
        %1538 = vmatprep.subr.bf16.mxu0 0
        %1539 = vmatpush1.bf16.xpose.msra.mxu0 0
        %1540 = vmatprep.subr.bf16.mxu0 0
        %1541 = vmatpush1.bf16.xpose.msra.mxu0 0
        %1542 = vmatprep.subr.bf16.mxu0 0
        %1543 = vmatpush1.bf16.xpose.msra.mxu0 0
        %1544 = vmatprep.subr.bf16.mxu0 0
        %1545 = vmatpush1.bf16.xpose.msra.mxu0 0
        %1546 = vmatprep.mubr.bf16.mxu0 0
        %1547 = vmatmul.mubr.bf16.gmra.mrb[0].mxu0 %v1509
        %v1548 = vpop.f32.mrb[0].mxu0
        %v1549 = vadd.f32 0.0, %v1548
        %v1550 = vpop.f32.mrb[0].mxu0
        %v1551 = vpop.f32.mrb[0].mxu0
        %v1552 = vpop.f32.mrb[0].mxu0
        %1553 = vdwg.mxu0
        %v1555 = vsel %vm1231, %v1222, 0
        %v1558 = vsel %vm1231, %v1230, 0
        %1560 = vmatprep.subr.bf16.mxu0 0
        %1561 = vmatpush1.bf16.xpose.msra.mxu0 %v1558
        %1562 = vmatprep.subr.bf16.mxu0 0
        %1563 = vmatpush1.bf16.xpose.msra.mxu0 0
        %1564 = vmatprep.subr.bf16.mxu0 0
        %1565 = vmatpush1.bf16.xpose.msra.mxu0 0
        %1566 = vmatprep.subr.bf16.mxu0 0
        %1567 = vmatpush1.bf16.xpose.msra.mxu0 0
        %1568 = vmatprep.subr.bf16.mxu0 0
        %1569 = vmatpush1.bf16.xpose.msra.mxu0 0
        %1570 = vmatprep.subr.bf16.mxu0 0
        %1571 = vmatpush1.bf16.xpose.msra.mxu0 0
        %1572 = vmatprep.subr.bf16.mxu0 0
        %1573 = vmatpush1.bf16.xpose.msra.mxu0 0
        %1574 = vmatprep.subr.bf16.mxu0 0
        %1575 = vmatpush1.bf16.xpose.msra.mxu0 0
        %1576 = vmatprep.subr.bf16.mxu0 0
        %1577 = vmatpush1.bf16.xpose.msra.mxu0 0
        %1578 = vmatprep.subr.bf16.mxu0 0
        %1579 = vmatpush1.bf16.xpose.msra.mxu0 0
        %1580 = vmatprep.subr.bf16.mxu0 0
        %1581 = vmatpush1.bf16.xpose.msra.mxu0 0
        %1582 = vmatprep.subr.bf16.mxu0 0
        %1583 = vmatpush1.bf16.xpose.msra.mxu0 0
        %1584 = vmatprep.subr.bf16.mxu0 0
        %1585 = vmatpush1.bf16.xpose.msra.mxu0 0
        %1586 = vmatprep.subr.bf16.mxu0 0
        %1587 = vmatpush1.bf16.xpose.msra.mxu0 0
        %1588 = vmatprep.subr.bf16.mxu0 0
        %1589 = vmatpush1.bf16.xpose.msra.mxu0 0
        %1590 = vmatprep.subr.bf16.mxu0 0
        %1591 = vmatpush1.bf16.xpose.msra.mxu0 0
        %1592 = vmatprep.mubr.bf16.mxu0 0
        %1593 = vmatmul.mubr.bf16.gmra.mrb[0].mxu0 %v1555
        %v1594 = vpop.f32.mrb[0].mxu0
        %v1595 = vadd.f32 0.0, %v1594
        %v1596 = vpop.f32.mrb[0].mxu0
        %v1597 = vpop.f32.mrb[0].mxu0
        %v1598 = vpop.f32.mrb[0].mxu0
        %1599 = vdwg.mxu0
        %vm1600 = vcmask 60416
        %v1601 = vsel %vm1600, %v1273, -inf
        %1602 = vmax.xlane.f32.xlu0 %v1601
        %v1603 = vpop.xlane.xlu0 %1602
        %v1604 = vsel %vm1600, %v1319, -inf
        %1605 = vmax.xlane.f32.xlu0 %v1604
        %v1606 = vpop.xlane.xlu0 %1605
        %v1607 = vsel %vm1600, %v1365, -inf
        %1608 = vmax.xlane.f32.xlu0 %v1607
        %v1609 = vpop.xlane.xlu0 %1608
        %v1610 = vsel %vm1600, %v1411, -inf
        %1611 = vmax.xlane.f32.xlu0 %v1610
        %v1612 = vpop.xlane.xlu0 %1611
        %v1613 = vsel %vm1600, %v1457, -inf
        %1614 = vmax.xlane.f32.xlu0 %v1613
        %v1615 = vpop.xlane.xlu0 %1614
        %v1616 = vsel %vm1600, %v1503, -inf
        %1617 = vmax.xlane.f32.xlu0 %v1616
        %v1618 = vpop.xlane.xlu0 %1617
        %v1619 = vsel %vm1600, %v1549, -inf
        %1620 = vmax.xlane.f32.xlu0 %v1619
        %v1621 = vpop.xlane.xlu0 %1620
        %v1622 = vsel %vm1600, %v1595, -inf
        %1623 = vmax.xlane.f32.xlu0 %v1622
        %v1624 = vpop.xlane.xlu0 %1623
        %v1625 = vsub.f32 %v1273, %v1603
        %v1626 = vsub.f32 %v1319, %v1606
        %v1627 = vsub.f32 %v1365, %v1609
        %v1628 = vsub.f32 %v1411, %v1612
        %v1629 = vsub.f32 %v1457, %v1615
        %v1630 = vsub.f32 %v1503, %v1618
        %v1631 = vsub.f32 %v1549, %v1621
        %v1632 = vsub.f32 %v1595, %v1624
        %v1633 = vmul.f32 %v1625, 1.442695
        %v1634 = vpow.pop %v1633
        %v1635 = vmul.f32 %v1626, 1.442695
        %v1636 = vpow.pop %v1635
        %v1637 = vmul.f32 %v1627, 1.442695
        %v1638 = vpow.pop %v1637
        %v1639 = vmul.f32 %v1628, 1.442695
        %v1640 = vpow.pop %v1639
        %v1641 = vmul.f32 %v1629, 1.442695
        %v1642 = vpow.pop %v1641
        %v1643 = vmul.f32 %v1630, 1.442695
        %v1644 = vpow.pop %v1643
        %v1645 = vmul.f32 %v1631, 1.442695
        %v1646 = vpow.pop %v1645
        %v1647 = vmul.f32 %v1632, 1.442695
        %v1648 = vpow.pop %v1647
        %v1649 = vsel %vm1600, %v1634, 0.0
        %1650 = vadd.xlane.f32.xlu0 %v1649
        %v1651 = vpop.xlane.xlu0 %1650
        %v1652 = vsel %vm1600, %v1636, 0.0
        %1653 = vadd.xlane.f32.xlu0 %v1652
        %v1654 = vpop.xlane.xlu0 %1653
        %v1655 = vsel %vm1600, %v1638, 0.0
        %1656 = vadd.xlane.f32.xlu0 %v1655
        %v1657 = vpop.xlane.xlu0 %1656
        %v1658 = vsel %vm1600, %v1640, 0.0
        %1659 = vadd.xlane.f32.xlu0 %v1658
        %v1660 = vpop.xlane.xlu0 %1659
        %v1661 = vsel %vm1600, %v1642, 0.0
        %1662 = vadd.xlane.f32.xlu0 %v1661
        %v1663 = vpop.xlane.xlu0 %1662
        %v1664 = vsel %vm1600, %v1644, 0.0
        %1665 = vadd.xlane.f32.xlu0 %v1664
        %v1666 = vpop.xlane.xlu0 %1665
        %v1667 = vsel %vm1600, %v1646, 0.0
        %1668 = vadd.xlane.f32.xlu0 %v1667
        %v1669 = vpop.xlane.xlu0 %1668
        %v1670 = vsel %vm1600, %v1648, 0.0
        %1671 = vadd.xlane.f32.xlu0 %v1670
        %v1672 = vpop.xlane.xlu0 %1671
        %v1673 = vrcp.pop %v1651
        %v1674 = vrcp.pop %v1654
        %v1675 = vrcp.pop %v1657
        %v1676 = vrcp.pop %v1660
        %v1677 = vrcp.pop %v1663
        %v1678 = vrcp.pop %v1666
        %v1679 = vrcp.pop %v1669
        %v1680 = vrcp.pop %v1672
        %v1681 = vmul.f32 %v1634, %v1673
        %v1682 = vmul.f32 %v1636, %v1674
        %v1683 = vmul.f32 %v1638, %v1675
        %v1684 = vmul.f32 %v1640, %v1676
        %v1685 = vmul.f32 %v1642, %v1677
        %v1686 = vmul.f32 %v1644, %v1678
        %v1687 = vmul.f32 %v1646, %v1679
        %v1688 = vmul.f32 %v1648, %v1680
        %v1689 = vpack.c.bf16 %v1681, %v1681
        %v1690 = vpack.c.bf16 %v1682, %v1682
        %v1691 = vpack.c.bf16 %v1683, %v1683
        %v1692 = vpack.c.bf16 %v1684, %v1684
        %v1693 = vpack.c.bf16 %v1685, %v1685
        %v1694 = vpack.c.bf16 %v1686, %v1686
        %v1695 = vpack.c.bf16 %v1687, %v1687
        %v1696 = vpack.c.bf16 %v1688, %v1688
        %v1697 = vpack.c.bf16 %v1143, %v1143
        %v1698 = vpack.c.bf16 %v1144, %v1144
        %v1699 = vpack.c.bf16 %v1145, %v1145
        %v1700 = vpack.c.bf16 %v1146, %v1146
        %v1701 = vpack.c.bf16 %v1211, %v1211
        %v1702 = vpack.c.bf16 %v1212, %v1212
        %v1703 = vpack.c.bf16 %v1213, %v1213
        %v1704 = vpack.c.bf16 %v1214, %v1214
        %v1706 = vsel %vm1231, %v1689, 0
        %vm1708 = vcmask 1043456
        %v1710 = vsel %vm1708, %v1697, 0
        %1712 = vmatprep.subr.bf16.mxu0 0
        %1713 = vmatpush1.bf16.msra.mxu0 %v1710
        %1714 = vmatprep.subr.bf16.mxu0 0
        %1715 = vmatpush1.bf16.msra.mxu0 0
        %1716 = vmatprep.subr.bf16.mxu0 0
        %1717 = vmatpush1.bf16.msra.mxu0 0
        %1718 = vmatprep.subr.bf16.mxu0 0
        %1719 = vmatpush1.bf16.msra.mxu0 0
        %1720 = vmatprep.subr.bf16.mxu0 0
        %1721 = vmatpush1.bf16.msra.mxu0 0
        %1722 = vmatprep.subr.bf16.mxu0 0
        %1723 = vmatpush1.bf16.msra.mxu0 0
        %1724 = vmatprep.subr.bf16.mxu0 0
        %1725 = vmatpush1.bf16.msra.mxu0 0
        %1726 = vmatprep.subr.bf16.mxu0 0
        %1727 = vmatpush1.bf16.msra.mxu0 0
        %1728 = vmatprep.subr.bf16.mxu0 0
        %1729 = vmatpush1.bf16.msra.mxu0 0
        %1730 = vmatprep.subr.bf16.mxu0 0
        %1731 = vmatpush1.bf16.msra.mxu0 0
        %1732 = vmatprep.subr.bf16.mxu0 0
        %1733 = vmatpush1.bf16.msra.mxu0 0
        %1734 = vmatprep.subr.bf16.mxu0 0
        %1735 = vmatpush1.bf16.msra.mxu0 0
        %1736 = vmatprep.subr.bf16.mxu0 0
        %1737 = vmatpush1.bf16.msra.mxu0 0
        %1738 = vmatprep.subr.bf16.mxu0 0
        %1739 = vmatpush1.bf16.msra.mxu0 0
        %1740 = vmatprep.subr.bf16.mxu0 0
        %1741 = vmatpush1.bf16.msra.mxu0 0
        %1742 = vmatprep.subr.bf16.mxu0 0
        %1743 = vmatpush1.bf16.msra.mxu0 0
        %1744 = vmatprep.mubr.bf16.mxu0 0
        %1745 = vmatmul.mubr.bf16.gmra.mrb[0].mxu0 %v1706
        %v1746 = vpop.f32.mrb[0].mxu0
        %v1747 = vadd.f32 0.0, %v1746
        %v1748 = vpop.f32.mrb[0].mxu0
        %v1749 = vpop.f32.mrb[0].mxu0
        %v1750 = vpop.f32.mrb[0].mxu0
        %1751 = vdwg.mxu0
        %v1753 = vsel %vm1231, %v1690, 0
        %v1756 = vsel %vm1708, %v1698, 0
        %1758 = vmatprep.subr.bf16.mxu0 0
        %1759 = vmatpush1.bf16.msra.mxu0 %v1756
        %1760 = vmatprep.subr.bf16.mxu0 0
        %1761 = vmatpush1.bf16.msra.mxu0 0
        %1762 = vmatprep.subr.bf16.mxu0 0
        %1763 = vmatpush1.bf16.msra.mxu0 0
        %1764 = vmatprep.subr.bf16.mxu0 0
        %1765 = vmatpush1.bf16.msra.mxu0 0
        %1766 = vmatprep.subr.bf16.mxu0 0
        %1767 = vmatpush1.bf16.msra.mxu0 0
        %1768 = vmatprep.subr.bf16.mxu0 0
        %1769 = vmatpush1.bf16.msra.mxu0 0
        %1770 = vmatprep.subr.bf16.mxu0 0
        %1771 = vmatpush1.bf16.msra.mxu0 0
        %1772 = vmatprep.subr.bf16.mxu0 0
        %1773 = vmatpush1.bf16.msra.mxu0 0
        %1774 = vmatprep.subr.bf16.mxu0 0
        %1775 = vmatpush1.bf16.msra.mxu0 0
        %1776 = vmatprep.subr.bf16.mxu0 0
        %1777 = vmatpush1.bf16.msra.mxu0 0
        %1778 = vmatprep.subr.bf16.mxu0 0
        %1779 = vmatpush1.bf16.msra.mxu0 0
        %1780 = vmatprep.subr.bf16.mxu0 0
        %1781 = vmatpush1.bf16.msra.mxu0 0
        %1782 = vmatprep.subr.bf16.mxu0 0
        %1783 = vmatpush1.bf16.msra.mxu0 0
        %1784 = vmatprep.subr.bf16.mxu0 0
        %1785 = vmatpush1.bf16.msra.mxu0 0
        %1786 = vmatprep.subr.bf16.mxu0 0
        %1787 = vmatpush1.bf16.msra.mxu0 0
        %1788 = vmatprep.subr.bf16.mxu0 0
        %1789 = vmatpush1.bf16.msra.mxu0 0
        %1790 = vmatprep.mubr.bf16.mxu0 0
        %1791 = vmatmul.mubr.bf16.gmra.mrb[0].mxu0 %v1753
        %v1792 = vpop.f32.mrb[0].mxu0
        %v1793 = vadd.f32 0.0, %v1792
        %v1794 = vpop.f32.mrb[0].mxu0
        %v1795 = vpop.f32.mrb[0].mxu0
        %v1796 = vpop.f32.mrb[0].mxu0
        %1797 = vdwg.mxu0
        %v1799 = vsel %vm1231, %v1691, 0
        %v1802 = vsel %vm1708, %v1699, 0
        %1804 = vmatprep.subr.bf16.mxu0 0
        %1805 = vmatpush1.bf16.msra.mxu0 %v1802
        %1806 = vmatprep.subr.bf16.mxu0 0
        %1807 = vmatpush1.bf16.msra.mxu0 0
        %1808 = vmatprep.subr.bf16.mxu0 0
        %1809 = vmatpush1.bf16.msra.mxu0 0
        %1810 = vmatprep.subr.bf16.mxu0 0
        %1811 = vmatpush1.bf16.msra.mxu0 0
        %1812 = vmatprep.subr.bf16.mxu0 0
        %1813 = vmatpush1.bf16.msra.mxu0 0
        %1814 = vmatprep.subr.bf16.mxu0 0
        %1815 = vmatpush1.bf16.msra.mxu0 0
        %1816 = vmatprep.subr.bf16.mxu0 0
        %1817 = vmatpush1.bf16.msra.mxu0 0
        %1818 = vmatprep.subr.bf16.mxu0 0
        %1819 = vmatpush1.bf16.msra.mxu0 0
        %1820 = vmatprep.subr.bf16.mxu0 0
        %1821 = vmatpush1.bf16.msra.mxu0 0
        %1822 = vmatprep.subr.bf16.mxu0 0
        %1823 = vmatpush1.bf16.msra.mxu0 0
        %1824 = vmatprep.subr.bf16.mxu0 0
        %1825 = vmatpush1.bf16.msra.mxu0 0
        %1826 = vmatprep.subr.bf16.mxu0 0
        %1827 = vmatpush1.bf16.msra.mxu0 0
        %1828 = vmatprep.subr.bf16.mxu0 0
        %1829 = vmatpush1.bf16.msra.mxu0 0
        %1830 = vmatprep.subr.bf16.mxu0 0
        %1831 = vmatpush1.bf16.msra.mxu0 0
        %1832 = vmatprep.subr.bf16.mxu0 0
        %1833 = vmatpush1.bf16.msra.mxu0 0
        %1834 = vmatprep.subr.bf16.mxu0 0
        %1835 = vmatpush1.bf16.msra.mxu0 0
        %1836 = vmatprep.mubr.bf16.mxu0 0
        %1837 = vmatmul.mubr.bf16.gmra.mrb[0].mxu0 %v1799
        %v1838 = vpop.f32.mrb[0].mxu0
        %v1839 = vadd.f32 0.0, %v1838
        %v1840 = vpop.f32.mrb[0].mxu0
        %v1841 = vpop.f32.mrb[0].mxu0
        %v1842 = vpop.f32.mrb[0].mxu0
        %1843 = vdwg.mxu0
        %v1845 = vsel %vm1231, %v1692, 0
        %v1848 = vsel %vm1708, %v1700, 0
        %1850 = vmatprep.subr.bf16.mxu0 0
        %1851 = vmatpush1.bf16.msra.mxu0 %v1848
        %1852 = vmatprep.subr.bf16.mxu0 0
        %1853 = vmatpush1.bf16.msra.mxu0 0
        %1854 = vmatprep.subr.bf16.mxu0 0
        %1855 = vmatpush1.bf16.msra.mxu0 0
        %1856 = vmatprep.subr.bf16.mxu0 0
        %1857 = vmatpush1.bf16.msra.mxu0 0
        %1858 = vmatprep.subr.bf16.mxu0 0
        %1859 = vmatpush1.bf16.msra.mxu0 0
        %1860 = vmatprep.subr.bf16.mxu0 0
        %1861 = vmatpush1.bf16.msra.mxu0 0
        %1862 = vmatprep.subr.bf16.mxu0 0
        %1863 = vmatpush1.bf16.msra.mxu0 0
        %1864 = vmatprep.subr.bf16.mxu0 0
        %1865 = vmatpush1.bf16.msra.mxu0 0
        %1866 = vmatprep.subr.bf16.mxu0 0
        %1867 = vmatpush1.bf16.msra.mxu0 0
        %1868 = vmatprep.subr.bf16.mxu0 0
        %1869 = vmatpush1.bf16.msra.mxu0 0
        %1870 = vmatprep.subr.bf16.mxu0 0
        %1871 = vmatpush1.bf16.msra.mxu0 0
        %1872 = vmatprep.subr.bf16.mxu0 0
        %1873 = vmatpush1.bf16.msra.mxu0 0
        %1874 = vmatprep.subr.bf16.mxu0 0
        %1875 = vmatpush1.bf16.msra.mxu0 0
        %1876 = vmatprep.subr.bf16.mxu0 0
        %1877 = vmatpush1.bf16.msra.mxu0 0
        %1878 = vmatprep.subr.bf16.mxu0 0
        %1879 = vmatpush1.bf16.msra.mxu0 0
        %1880 = vmatprep.subr.bf16.mxu0 0
        %1881 = vmatpush1.bf16.msra.mxu0 0
        %1882 = vmatprep.mubr.bf16.mxu0 0
        %1883 = vmatmul.mubr.bf16.gmra.mrb[0].mxu0 %v1845
        %v1884 = vpop.f32.mrb[0].mxu0
        %v1885 = vadd.f32 0.0, %v1884
        %v1886 = vpop.f32.mrb[0].mxu0
        %v1887 = vpop.f32.mrb[0].mxu0
        %v1888 = vpop.f32.mrb[0].mxu0
        %1889 = vdwg.mxu0
        %v1891 = vsel %vm1231, %v1693, 0
        %v1894 = vsel %vm1708, %v1701, 0
        %1896 = vmatprep.subr.bf16.mxu0 0
        %1897 = vmatpush1.bf16.msra.mxu0 %v1894
        %1898 = vmatprep.subr.bf16.mxu0 0
        %1899 = vmatpush1.bf16.msra.mxu0 0
        %1900 = vmatprep.subr.bf16.mxu0 0
        %1901 = vmatpush1.bf16.msra.mxu0 0
        %1902 = vmatprep.subr.bf16.mxu0 0
        %1903 = vmatpush1.bf16.msra.mxu0 0
        %1904 = vmatprep.subr.bf16.mxu0 0
        %1905 = vmatpush1.bf16.msra.mxu0 0
        %1906 = vmatprep.subr.bf16.mxu0 0
        %1907 = vmatpush1.bf16.msra.mxu0 0
        %1908 = vmatprep.subr.bf16.mxu0 0
        %1909 = vmatpush1.bf16.msra.mxu0 0
        %1910 = vmatprep.subr.bf16.mxu0 0
        %1911 = vmatpush1.bf16.msra.mxu0 0
        %1912 = vmatprep.subr.bf16.mxu0 0
        %1913 = vmatpush1.bf16.msra.mxu0 0
        %1914 = vmatprep.subr.bf16.mxu0 0
        %1915 = vmatpush1.bf16.msra.mxu0 0
        %1916 = vmatprep.subr.bf16.mxu0 0
        %1917 = vmatpush1.bf16.msra.mxu0 0
        %1918 = vmatprep.subr.bf16.mxu0 0
        %1919 = vmatpush1.bf16.msra.mxu0 0
        %1920 = vmatprep.subr.bf16.mxu0 0
        %1921 = vmatpush1.bf16.msra.mxu0 0
        %1922 = vmatprep.subr.bf16.mxu0 0
        %1923 = vmatpush1.bf16.msra.mxu0 0
        %1924 = vmatprep.subr.bf16.mxu0 0
        %1925 = vmatpush1.bf16.msra.mxu0 0
        %1926 = vmatprep.subr.bf16.mxu0 0
        %1927 = vmatpush1.bf16.msra.mxu0 0
        %1928 = vmatprep.mubr.bf16.mxu0 0
        %1929 = vmatmul.mubr.bf16.gmra.mrb[0].mxu0 %v1891
        %v1930 = vpop.f32.mrb[0].mxu0
        %v1931 = vadd.f32 0.0, %v1930
        %v1932 = vpop.f32.mrb[0].mxu0
        %v1933 = vpop.f32.mrb[0].mxu0
        %v1934 = vpop.f32.mrb[0].mxu0
        %1935 = vdwg.mxu0
        %v1937 = vsel %vm1231, %v1694, 0
        %v1940 = vsel %vm1708, %v1702, 0
        %1942 = vmatprep.subr.bf16.mxu0 0
        %1943 = vmatpush1.bf16.msra.mxu0 %v1940
        %1944 = vmatprep.subr.bf16.mxu0 0
        %1945 = vmatpush1.bf16.msra.mxu0 0
        %1946 = vmatprep.subr.bf16.mxu0 0
        %1947 = vmatpush1.bf16.msra.mxu0 0
        %1948 = vmatprep.subr.bf16.mxu0 0
        %1949 = vmatpush1.bf16.msra.mxu0 0
        %1950 = vmatprep.subr.bf16.mxu0 0
        %1951 = vmatpush1.bf16.msra.mxu0 0
        %1952 = vmatprep.subr.bf16.mxu0 0
        %1953 = vmatpush1.bf16.msra.mxu0 0
        %1954 = vmatprep.subr.bf16.mxu0 0
        %1955 = vmatpush1.bf16.msra.mxu0 0
        %1956 = vmatprep.subr.bf16.mxu0 0
        %1957 = vmatpush1.bf16.msra.mxu0 0
        %1958 = vmatprep.subr.bf16.mxu0 0
        %1959 = vmatpush1.bf16.msra.mxu0 0
        %1960 = vmatprep.subr.bf16.mxu0 0
        %1961 = vmatpush1.bf16.msra.mxu0 0
        %1962 = vmatprep.subr.bf16.mxu0 0
        %1963 = vmatpush1.bf16.msra.mxu0 0
        %1964 = vmatprep.subr.bf16.mxu0 0
        %1965 = vmatpush1.bf16.msra.mxu0 0
        %1966 = vmatprep.subr.bf16.mxu0 0
        %1967 = vmatpush1.bf16.msra.mxu0 0
        %1968 = vmatprep.subr.bf16.mxu0 0
        %1969 = vmatpush1.bf16.msra.mxu0 0
        %1970 = vmatprep.subr.bf16.mxu0 0
        %1971 = vmatpush1.bf16.msra.mxu0 0
        %1972 = vmatprep.subr.bf16.mxu0 0
        %1973 = vmatpush1.bf16.msra.mxu0 0
        %1974 = vmatprep.mubr.bf16.mxu0 0
        %1975 = vmatmul.mubr.bf16.gmra.mrb[0].mxu0 %v1937
        %v1976 = vpop.f32.mrb[0].mxu0
        %v1977 = vadd.f32 0.0, %v1976
        %v1978 = vpop.f32.mrb[0].mxu0
        %v1979 = vpop.f32.mrb[0].mxu0
        %v1980 = vpop.f32.mrb[0].mxu0
        %1981 = vdwg.mxu0
        %v1983 = vsel %vm1231, %v1695, 0
        %v1986 = vsel %vm1708, %v1703, 0
        %1988 = vmatprep.subr.bf16.mxu0 0
        %1989 = vmatpush1.bf16.msra.mxu0 %v1986
        %1990 = vmatprep.subr.bf16.mxu0 0
        %1991 = vmatpush1.bf16.msra.mxu0 0
        %1992 = vmatprep.subr.bf16.mxu0 0
        %1993 = vmatpush1.bf16.msra.mxu0 0
        %1994 = vmatprep.subr.bf16.mxu0 0
        %1995 = vmatpush1.bf16.msra.mxu0 0
        %1996 = vmatprep.subr.bf16.mxu0 0
        %1997 = vmatpush1.bf16.msra.mxu0 0
        %1998 = vmatprep.subr.bf16.mxu0 0
        %1999 = vmatpush1.bf16.msra.mxu0 0
        %2000 = vmatprep.subr.bf16.mxu0 0
        %2001 = vmatpush1.bf16.msra.mxu0 0
        %2002 = vmatprep.subr.bf16.mxu0 0
        %2003 = vmatpush1.bf16.msra.mxu0 0
        %2004 = vmatprep.subr.bf16.mxu0 0
        %2005 = vmatpush1.bf16.msra.mxu0 0
        %2006 = vmatprep.subr.bf16.mxu0 0
        %2007 = vmatpush1.bf16.msra.mxu0 0
        %2008 = vmatprep.subr.bf16.mxu0 0
        %2009 = vmatpush1.bf16.msra.mxu0 0
        %2010 = vmatprep.subr.bf16.mxu0 0
        %2011 = vmatpush1.bf16.msra.mxu0 0
        %2012 = vmatprep.subr.bf16.mxu0 0
        %2013 = vmatpush1.bf16.msra.mxu0 0
        %2014 = vmatprep.subr.bf16.mxu0 0
        %2015 = vmatpush1.bf16.msra.mxu0 0
        %2016 = vmatprep.subr.bf16.mxu0 0
        %2017 = vmatpush1.bf16.msra.mxu0 0
        %2018 = vmatprep.subr.bf16.mxu0 0
        %2019 = vmatpush1.bf16.msra.mxu0 0
        %2020 = vmatprep.mubr.bf16.mxu0 0
        %2021 = vmatmul.mubr.bf16.gmra.mrb[0].mxu0 %v1983
        %v2022 = vpop.f32.mrb[0].mxu0
        %v2023 = vadd.f32 0.0, %v2022
        %v2024 = vpop.f32.mrb[0].mxu0
        %v2025 = vpop.f32.mrb[0].mxu0
        %v2026 = vpop.f32.mrb[0].mxu0
        %2027 = vdwg.mxu0
        %v2029 = vsel %vm1231, %v1696, 0
        %v2032 = vsel %vm1708, %v1704, 0
        %2034 = vmatprep.subr.bf16.mxu0 0
        %2035 = vmatpush1.bf16.msra.mxu0 %v2032
        %2036 = vmatprep.subr.bf16.mxu0 0
        %2037 = vmatpush1.bf16.msra.mxu0 0
        %2038 = vmatprep.subr.bf16.mxu0 0
        %2039 = vmatpush1.bf16.msra.mxu0 0
        %2040 = vmatprep.subr.bf16.mxu0 0
        %2041 = vmatpush1.bf16.msra.mxu0 0
        %2042 = vmatprep.subr.bf16.mxu0 0
        %2043 = vmatpush1.bf16.msra.mxu0 0
        %2044 = vmatprep.subr.bf16.mxu0 0
        %2045 = vmatpush1.bf16.msra.mxu0 0
        %2046 = vmatprep.subr.bf16.mxu0 0
        %2047 = vmatpush1.bf16.msra.mxu0 0
        %2048 = vmatprep.subr.bf16.mxu0 0
        %2049 = vmatpush1.bf16.msra.mxu0 0
        %2050 = vmatprep.subr.bf16.mxu0 0
        %2051 = vmatpush1.bf16.msra.mxu0 0
        %2052 = vmatprep.subr.bf16.mxu0 0
        %2053 = vmatpush1.bf16.msra.mxu0 0
        %2054 = vmatprep.subr.bf16.mxu0 0
        %2055 = vmatpush1.bf16.msra.mxu0 0
        %2056 = vmatprep.subr.bf16.mxu0 0
        %2057 = vmatpush1.bf16.msra.mxu0 0
        %2058 = vmatprep.subr.bf16.mxu0 0
        %2059 = vmatpush1.bf16.msra.mxu0 0
        %2060 = vmatprep.subr.bf16.mxu0 0
        %2061 = vmatpush1.bf16.msra.mxu0 0
        %2062 = vmatprep.subr.bf16.mxu0 0
        %2063 = vmatpush1.bf16.msra.mxu0 0
        %2064 = vmatprep.subr.bf16.mxu0 0
        %2065 = vmatpush1.bf16.msra.mxu0 0
        %2066 = vmatprep.mubr.bf16.mxu0 0
        %2067 = vmatmul.mubr.bf16.gmra.mrb[0].mxu0 %v2029
        %v2068 = vpop.f32.mrb[0].mxu0
        %v2069 = vadd.f32 0.0, %v2068
        %v2070 = vpop.f32.mrb[0].mxu0
        %v2071 = vpop.f32.mrb[0].mxu0
        %v2072 = vpop.f32.mrb[0].mxu0
        %2073 = vdwg.mxu0
        %v2074 = vcombine.low %v1747, %v1839
        %v2076 = vunpack.c.l.s4 1983009808
        %v2077 = vunpack.c.0.s8 %v2076
        %v2078 = vlaneseq
        %v2079 = vshrl.u32 %v2078, 7
        %v2080 = vsub.s32 %v2077, %v2079
        %v2081 = vrot.slane %v2074, %v2080
        %v2082 = vcombine.low %v1793, %v1885
        %v2084 = vunpack.c.l.s4 1983009808
        %v2085 = vunpack.c.0.s8 %v2084
        %v2086 = vlaneseq
        %v2087 = vshrl.u32 %v2086, 7
        %v2088 = vsub.s32 %v2085, %v2087
        %v2089 = vrot.slane %v2082, %v2088
        %v2090 = vcombine.low %v2081, %v2089
        %v2091 = vcombine.high %v2081, %v2089
        %v2093 = vunpack.c.l.s4 1934713408
        %v2094 = vunpack.c.0.s8 %v2093
        %v2095 = vlaneseq
        %v2096 = vshrl.u32 %v2095, 7
        %v2097 = vsub.s32 %v2094, %v2096
        %v2098 = vrot.slane %v2090, %v2097
        %v2100 = vunpack.c.l.s4 1934713408
        %v2101 = vunpack.c.0.s8 %v2100
        %v2102 = vlaneseq
        %v2103 = vshrl.u32 %v2102, 7
        %v2104 = vsub.s32 %v2101, %v2103
        %v2105 = vrot.slane %v2091, %v2104
        %v2106 = vcombine.high %v2098, 0.0
        %v2107 = vcombine.high %v2105, 0.0
        %v2108 = vcombine.low %v1931, %v2023
        %v2110 = vunpack.c.l.s4 1983009808
        %v2111 = vunpack.c.0.s8 %v2110
        %v2112 = vlaneseq
        %v2113 = vshrl.u32 %v2112, 7
        %v2114 = vsub.s32 %v2111, %v2113
        %v2115 = vrot.slane %v2108, %v2114
        %v2116 = vcombine.low %v1977, %v2069
        %v2118 = vunpack.c.l.s4 1983009808
        %v2119 = vunpack.c.0.s8 %v2118
        %v2120 = vlaneseq
        %v2121 = vshrl.u32 %v2120, 7
        %v2122 = vsub.s32 %v2119, %v2121
        %v2123 = vrot.slane %v2116, %v2122
        %v2124 = vcombine.low %v2115, %v2123
        %v2125 = vcombine.high %v2115, %v2123
        %v2127 = vunpack.c.l.s4 1934713408
        %v2128 = vunpack.c.0.s8 %v2127
        %v2129 = vlaneseq
        %v2130 = vshrl.u32 %v2129, 7
        %v2131 = vsub.s32 %v2128, %v2130
        %v2132 = vrot.slane %v2124, %v2131
        %v2134 = vunpack.c.l.s4 1934713408
        %v2135 = vunpack.c.0.s8 %v2134
        %v2136 = vlaneseq
        %v2137 = vshrl.u32 %v2136, 7
        %v2138 = vsub.s32 %v2135, %v2137
        %v2139 = vrot.slane %v2125, %v2138
        %v2140 = vcombine.high %v2132, 0.0
        %v2141 = vcombine.high %v2139, 0.0
        %v2142 = vcombine.low %v2098, %v2106
        %v2144 = vunpack.c.l.s4 1983009808
        %v2145 = vunpack.c.0.s8 %v2144
        %v2146 = vlaneseq
        %v2147 = vshrl.u32 %v2146, 7
        %v2148 = vsub.s32 %v2145, %v2147
        %v2149 = vrot.slane %v2142, %v2148
        %v2150 = vcombine.low %v2132, %v2140
        %v2152 = vunpack.c.l.s4 1983009808
        %v2153 = vunpack.c.0.s8 %v2152
        %v2154 = vlaneseq
        %v2155 = vshrl.u32 %v2154, 7
        %v2156 = vsub.s32 %v2153, %v2155
        %v2157 = vrot.slane %v2150, %v2156
        %v2158 = vcombine.low %v2105, %v2107
        %v2160 = vunpack.c.l.s4 1983009808
        %v2161 = vunpack.c.0.s8 %v2160
        %v2162 = vlaneseq
        %v2163 = vshrl.u32 %v2162, 7
        %v2164 = vsub.s32 %v2161, %v2163
        %v2165 = vrot.slane %v2158, %v2164
        %v2166 = vcombine.low %v2139, %v2141
        %v2168 = vunpack.c.l.s4 1983009808
        %v2169 = vunpack.c.0.s8 %v2168
        %v2170 = vlaneseq
        %v2171 = vshrl.u32 %v2170, 7
        %v2172 = vsub.s32 %v2169, %v2171
        %v2173 = vrot.slane %v2166, %v2172
        %v2174 = vcombine.low %v2149, %v2157
        %v2175 = vcombine.high %v2149, %v2157
        %v2177 = vunpack.c.l.s4 1934713408
        %v2178 = vunpack.c.0.s8 %v2177
        %v2179 = vlaneseq
        %v2180 = vshrl.u32 %v2179, 7
        %v2181 = vsub.s32 %v2178, %v2180
        %v2182 = vrot.slane %v2174, %v2181
        %v2184 = vunpack.c.l.s4 1934713408
        %v2185 = vunpack.c.0.s8 %v2184
        %v2186 = vlaneseq
        %v2187 = vshrl.u32 %v2186, 7
        %v2188 = vsub.s32 %v2185, %v2187
        %v2189 = vrot.slane %v2175, %v2188
        %v2190 = vcombine.low %v2165, %v2173
        %v2191 = vcombine.high %v2165, %v2173
        %v2193 = vunpack.c.l.s4 1934713408
        %v2194 = vunpack.c.0.s8 %v2193
        %v2195 = vlaneseq
        %v2196 = vshrl.u32 %v2195, 7
        %v2197 = vsub.s32 %v2194, %v2196
        %v2198 = vrot.slane %v2190, %v2197
        %v2200 = vunpack.c.l.s4 1934713408
        %v2201 = vunpack.c.0.s8 %v2200
        %v2202 = vlaneseq
        %v2203 = vshrl.u32 %v2202, 7
        %v2204 = vsub.s32 %v2201, %v2203
        %v2205 = vrot.slane %v2191, %v2204
        %v2206 = vcombine.low %v2182, %v2198
        %v2207 = vcombine.high %v2182, %v2198
        %v2208 = vcombine.low %v2189, %v2205
        %v2209 = vcombine.high %v2189, %v2205
        %2211 = vrot.lane.b32.xlu0 %v2207, 8
        %v2212 = vpop.permute.xlu0 %2211
        %2215 = vrot.lane.b32.xlu0 %v2208, 16
        %v2216 = vpop.permute.xlu0 %2215
        %2219 = vrot.lane.b32.xlu0 %v2209, 24
        %v2220 = vpop.permute.xlu0 %2219
        %v2222 = vsel %vm1231, %v2206, %v2212
        %vm2223 = vcmask 130048
        %v2224 = vsel %vm2223, %v2222, %v2216
        %vm2225 = vcmask 195584
        %v2226 = vsel %vm2225, %v2224, %v2220
        %v2227 = vpack.c.bf16 %v2226, %v2226
        %v2228 = vld [vmem:[%s3] sm:$0xf]
        %v2229 = vld [vmem:[%s3 + $0x4] sm:$0xf]
        %v2230 = vld [vmem:[%s3 + $0x8] sm:$0xf]
        %v2231 = vld [vmem:[%s3 + $0xc] sm:$0xf]
        %v2232 = vld [vmem:[%s6] sm:$0x1]
        %v2234 = vlaneseq
        %v2235 = vshrl.u32 %v2234, 7
        %v2236 = vsub.s32 0, %v2235
        %v2237 = vrot.slane %v2232, %v2236
        %v2242 = vunpack.c.l.b16 %v2228
        %v2243 = vunpack.c.l.b16 %v2229
        %v2244 = vunpack.c.l.b16 %v2230
        %v2245 = vunpack.c.l.b16 %v2231
        %v2246 = vpack.c.b16 %v2243, %v2242
        %v2247 = vpack.c.b16 %v2245, %v2244
        %2250 = vrot.lane.b32.xlu0 %v2237, 32
        %v2251 = vpop.permute.xlu0 %2250
        %v2254 = vsel %vm384, %v2227, 0
        %2256 = vmatprep.subr.bf16.mxu0 0
        %2257 = vmatpush1.bf16.msra.mxu0 %v2246
        %2258 = vmatprep.subr.bf16.mxu0 0
        %2259 = vmatpush1.bf16.msra.mxu0 %v2247
        %2260 = vmatprep.subr.bf16.mxu0 0
        %2261 = vmatpush1.bf16.msra.mxu0 0
        %2262 = vmatprep.subr.bf16.mxu0 0
        %2263 = vmatpush1.bf16.msra.mxu0 0
        %2264 = vmatprep.subr.bf16.mxu0 0
        %2265 = vmatpush1.bf16.msra.mxu0 0
        %2266 = vmatprep.subr.bf16.mxu0 0
        %2267 = vmatpush1.bf16.msra.mxu0 0
        %2268 = vmatprep.subr.bf16.mxu0 0
        %2269 = vmatpush1.bf16.msra.mxu0 0
        %2270 = vmatprep.subr.bf16.mxu0 0
        %2271 = vmatpush1.bf16.msra.mxu0 0
        %2272 = vmatprep.subr.bf16.mxu0 0
        %2273 = vmatpush1.bf16.msra.mxu0 0
        %2274 = vmatprep.subr.bf16.mxu0 0
        %2275 = vmatpush1.bf16.msra.mxu0 0
        %2276 = vmatprep.subr.bf16.mxu0 0
        %2277 = vmatpush1.bf16.msra.mxu0 0
        %2278 = vmatprep.subr.bf16.mxu0 0
        %2279 = vmatpush1.bf16.msra.mxu0 0
        %2280 = vmatprep.subr.bf16.mxu0 0
        %2281 = vmatpush1.bf16.msra.mxu0 0
        %2282 = vmatprep.subr.bf16.mxu0 0
        %2283 = vmatpush1.bf16.msra.mxu0 0
        %2284 = vmatprep.subr.bf16.mxu0 0
        %2285 = vmatpush1.bf16.msra.mxu0 0
        %2286 = vmatprep.subr.bf16.mxu0 0
        %2287 = vmatpush1.bf16.msra.mxu0 0
        %2288 = vmatprep.mubr.bf16.mxu0 0
        %2289 = vmatmul.mubr.bf16.gmra.mrb[0].mxu0 %v2254
        %v2290 = vpop.f32.mrb[0].mxu0
        %v2291 = vadd.f32 %v2251, %v2290
        %v2292 = vpop.f32.mrb[0].mxu0
        %v2293 = vpop.f32.mrb[0].mxu0
        %v2294 = vpop.f32.mrb[0].mxu0
        %2295 = vdwg.mxu0
        %v2296 = vpack.c.bf16 %v2291, %v2291
        %v2297 = vld [vmem:[%s4] sm:$0xf]
        %v2298 = vld [vmem:[%s4 + $0x4] sm:$0xf]
        %v2299 = vld [vmem:[%s4 + $0x8] sm:$0xf]
        %v2300 = vld [vmem:[%s4 + $0xc] sm:$0xf]
        %v2301 = vld [vmem:[%s6 + $0x1] sm:$0x1]
        %v2303 = vlaneseq
        %v2304 = vshrl.u32 %v2303, 7
        %v2305 = vsub.s32 0, %v2304
        %v2306 = vrot.slane %v2301, %v2305
        %v2312 = vunpack.c.l.b16 %v2297
        %v2313 = vunpack.c.l.b16 %v2298
        %v2314 = vunpack.c.l.b16 %v2299
        %v2315 = vunpack.c.l.b16 %v2300
        %v2316 = vpack.c.b16 %v2313, %v2312
        %v2317 = vpack.c.b16 %v2315, %v2314
        %v2321 = vsel %vm384, %v2296, 0
        %2323 = vmatprep.subr.bf16.mxu0 0
        %2324 = vmatpush1.bf16.msra.mxu0 %v2316
        %2325 = vmatprep.subr.bf16.mxu0 0
        %2326 = vmatpush1.bf16.msra.mxu0 %v2317
        %2327 = vmatprep.subr.bf16.mxu0 0
        %2328 = vmatpush1.bf16.msra.mxu0 0
        %2329 = vmatprep.subr.bf16.mxu0 0
        %2330 = vmatpush1.bf16.msra.mxu0 0
        %2331 = vmatprep.subr.bf16.mxu0 0
        %2332 = vmatpush1.bf16.msra.mxu0 0
        %2333 = vmatprep.subr.bf16.mxu0 0
        %2334 = vmatpush1.bf16.msra.mxu0 0
        %2335 = vmatprep.subr.bf16.mxu0 0
        %2336 = vmatpush1.bf16.msra.mxu0 0
        %2337 = vmatprep.subr.bf16.mxu0 0
        %2338 = vmatpush1.bf16.msra.mxu0 0
        %2339 = vmatprep.subr.bf16.mxu0 0
        %2340 = vmatpush1.bf16.msra.mxu0 0
        %2341 = vmatprep.subr.bf16.mxu0 0
        %2342 = vmatpush1.bf16.msra.mxu0 0
        %2343 = vmatprep.subr.bf16.mxu0 0
        %2344 = vmatpush1.bf16.msra.mxu0 0
        %2345 = vmatprep.subr.bf16.mxu0 0
        %2346 = vmatpush1.bf16.msra.mxu0 0
        %2347 = vmatprep.subr.bf16.mxu0 0
        %2348 = vmatpush1.bf16.msra.mxu0 0
        %2349 = vmatprep.subr.bf16.mxu0 0
        %2350 = vmatpush1.bf16.msra.mxu0 0
        %2351 = vmatprep.subr.bf16.mxu0 0
        %2352 = vmatpush1.bf16.msra.mxu0 0
        %2353 = vmatprep.subr.bf16.mxu0 0
        %2354 = vmatpush1.bf16.msra.mxu0 0
        %2355 = vmatprep.mubr.bf16.mxu0 0
        %2356 = vmatmul.mubr.bf16.gmra.mrb[0].mxu0 %v2321
        %v2357 = vpop.f32.mrb[0].mxu0
        %v2358 = vadd.f32 %v2306, %v2357
        %v2359 = vpop.f32.mrb[0].mxu0
        %v2360 = vpop.f32.mrb[0].mxu0
        %v2361 = vpop.f32.mrb[0].mxu0
        %2362 = vdwg.mxu0
        %v2363 = vmax.f32 %v2358, 0.0
        %v2364 = vpack.c.bf16 %v2363, %v2363
        %v2365 = vld [vmem:[%s5] sm:$0xf]
        %v2366 = vld [vmem:[%s5 + $0x4] sm:$0xf]
        %v2367 = vld [vmem:[%s5 + $0x8] sm:$0xf]
        %v2368 = vld [vmem:[%s5 + $0xc] sm:$0xf]
        %v2369 = vld [vmem:[%s5 + $0x10] sm:$0xf]
        %v2370 = vld [vmem:[%s5 + $0x14] sm:$0xf]
        %v2371 = vld [vmem:[%s5 + $0x18] sm:$0xf]
        %v2372 = vld [vmem:[%s5 + $0x1c] sm:$0xf]
        %v2373 = vld [vmem:[%s5 + $0x20] sm:$0xf]
        %v2374 = vld [vmem:[%s5 + $0x24] sm:$0xf]
        %v2375 = vld [vmem:[%s5 + $0x28] sm:$0xf]
        %v2376 = vld [vmem:[%s5 + $0x2c] sm:$0xf]
        %v2377 = vld [vmem:[%s5 + $0x30] sm:$0xf]
        %v2378 = vld [vmem:[%s5 + $0x34] sm:$0xf]
        %v2379 = vld [vmem:[%s5 + $0x38] sm:$0xf]
        %v2380 = vld [vmem:[%s5 + $0x3c] sm:$0xf]
        %v2381 = vld [vmem:[%s6 + $0x2] sm:$0x1]
        %v2383 = vlaneseq
        %v2384 = vshrl.u32 %v2383, 7
        %v2385 = vsub.s32 0, %v2384
        %v2386 = vrot.slane %v2381, %v2385
        %v2404 = vunpack.c.l.b16 %v2365
        %v2405 = vunpack.c.l.b16 %v2366
        %v2406 = vunpack.c.l.b16 %v2367
        %v2407 = vunpack.c.l.b16 %v2368
        %v2408 = vunpack.c.l.b16 %v2369
        %v2409 = vunpack.c.l.b16 %v2370
        %v2410 = vunpack.c.l.b16 %v2371
        %v2411 = vunpack.c.l.b16 %v2372
        %v2412 = vunpack.c.l.b16 %v2373
        %v2413 = vunpack.c.l.b16 %v2374
        %v2414 = vunpack.c.l.b16 %v2375
        %v2415 = vunpack.c.l.b16 %v2376
        %v2416 = vunpack.c.l.b16 %v2377
        %v2417 = vunpack.c.l.b16 %v2378
        %v2418 = vunpack.c.l.b16 %v2379
        %v2419 = vunpack.c.l.b16 %v2380
        %v2420 = vpack.c.b16 %v2405, %v2404
        %v2421 = vpack.c.b16 %v2407, %v2406
        %v2422 = vpack.c.b16 %v2409, %v2408
        %v2423 = vpack.c.b16 %v2411, %v2410
        %v2424 = vpack.c.b16 %v2413, %v2412
        %v2425 = vpack.c.b16 %v2415, %v2414
        %v2426 = vpack.c.b16 %v2417, %v2416
        %v2427 = vpack.c.b16 %v2419, %v2418
        %2436 = vmatprep.subr.bf16.mxu0 0
        %2437 = vmatpush1.bf16.msra.mxu0 %v2420
        %2438 = vmatprep.subr.bf16.mxu0 0
        %2439 = vmatpush1.bf16.msra.mxu0 %v2421
        %2440 = vmatprep.subr.bf16.mxu0 0
        %2441 = vmatpush1.bf16.msra.mxu0 %v2422
        %2442 = vmatprep.subr.bf16.mxu0 0
        %2443 = vmatpush1.bf16.msra.mxu0 %v2423
        %2444 = vmatprep.subr.bf16.mxu0 0
        %2445 = vmatpush1.bf16.msra.mxu0 %v2424
        %2446 = vmatprep.subr.bf16.mxu0 0
        %2447 = vmatpush1.bf16.msra.mxu0 %v2425
        %2448 = vmatprep.subr.bf16.mxu0 0
        %2449 = vmatpush1.bf16.msra.mxu0 %v2426
        %2450 = vmatprep.subr.bf16.mxu0 0
        %2451 = vmatpush1.bf16.msra.mxu0 %v2427
        %2452 = vmatprep.subr.bf16.mxu0 0
        %2453 = vmatpush1.bf16.msra.mxu0 0
        %2454 = vmatprep.subr.bf16.mxu0 0
        %2455 = vmatpush1.bf16.msra.mxu0 0
        %2456 = vmatprep.subr.bf16.mxu0 0
        %2457 = vmatpush1.bf16.msra.mxu0 0
        %2458 = vmatprep.subr.bf16.mxu0 0
        %2459 = vmatpush1.bf16.msra.mxu0 0
        %2460 = vmatprep.subr.bf16.mxu0 0
        %2461 = vmatpush1.bf16.msra.mxu0 0
        %2462 = vmatprep.subr.bf16.mxu0 0
        %2463 = vmatpush1.bf16.msra.mxu0 0
        %2464 = vmatprep.subr.bf16.mxu0 0
        %2465 = vmatpush1.bf16.msra.mxu0 0
        %2466 = vmatprep.subr.bf16.mxu0 0
        %2467 = vmatpush1.bf16.msra.mxu0 0
        %2468 = vmatprep.mubr.bf16.mxu0 0
        %2469 = vmatmul.mubr.bf16.gmra.mrb[0].mxu0 %v2364
        %v2470 = vpop.f32.mrb[0].mxu0
        %v2471 = vadd.f32 %v2386, %v2470
        %v2472 = vpop.f32.mrb[0].mxu0
        %v2473 = vpop.f32.mrb[0].mxu0
        %v2474 = vpop.f32.mrb[0].mxu0
        %2475 = vdwg.mxu0
        %v2477 = vcombine.high %v2471, %v2471
        %v2479 = vunpack.c.l.s4 1983009808
        %v2480 = vunpack.c.0.s8 %v2479
        %v2481 = vlaneseq
        %v2482 = vshrl.u32 %v2481, 7
        %v2483 = vsub.s32 %v2480, %v2482
        %v2484 = vrot.slane %v2471, %v2483
        %v2486 = vunpack.c.l.s4 1983009808
        %v2487 = vunpack.c.0.s8 %v2486
        %v2488 = vlaneseq
        %v2489 = vshrl.u32 %v2488, 7
        %v2490 = vsub.s32 %v2487, %v2489
        %v2491 = vrot.slane %v2477, %v2490
        %v2492 = vcombine.high %v2484, %v2484
        %v2493 = vcombine.high %v2491, %v2491
        %vm2498 = vcmask 254976
        %2499 = vst.msk [vmem:[%s272] sm:$0x3] %vm2498, %v2484
        %2500 = vst.msk [vmem:[%s272 + $0x2] sm:$0x3] %vm2498, %v2492
        %2501 = vst.msk [vmem:[%s272 + $0x4] sm:$0x3] %vm2498, %v2491
        %2502 = vst.msk [vmem:[%s272 + $0x6] sm:$0x3] %vm2498, %v2493
        %s2503 = sand.u32 %s181, 1
        %s2504 = scalar_lea.sflag [#allocation3], %s2503
        %s2505 = sand.u32 %s181, 1
        %s2506 = smul.addr %s2505, 8
        %s2507 = scalar_lea.vmem [#allocation2], %s2506
        // Predicated region
        $region49: #{tpu_custom_call.1} parent=47 // pred_check
          %p2508 = pneg %p191
        $region50: #{tpu_custom_call.1} parent=47 // pred_check_branch
          %2510 = sbr.rel (%p2508) target = $region52
        $region51: #{tpu_custom_call.1} parent=47 // pred_region
          %s2511 = smul.u32 4, %s21
          %s2513 = ssub.s32 128, 128
          %2514 = vsyncadd %s2504, %s2513
          %s2515 = smul.addr %s2511, 32
          %s2516 = scalar_lea.hbm %s7, %s2515
          %s2517 = sshll.u32 %s2507, 4
          %s2518 = int_to_ptr.vmem [resolvable:$true] %s2517
          %2523 = dma.vmem_to_hbm [thread:$0]  %s2518, 128, %s2516, %s2504, 32, 32, 2
        $region52: #{tpu_custom_call.1} parent=47 // pred_fallthru
          _
      $region48: #{tpu_custom_call.1} parent=5 // pred_fallthru
        _
      %p2524 = scmp.le.s32.totalorder 2, %s16
      // Predicated region
      $region53: #{tpu_custom_call.1} parent=5 // pred_check
        %p2525 = pneg %p2524
      $region54: #{tpu_custom_call.1} parent=5 // pred_check_branch
        %2527 = sbr.rel (%p2525) target = $region56
      $region55: #{tpu_custom_call.1} parent=5 // pred_region
        %s2528 = ssub.s32 %s16, 2
        // Predicated region
        $region57: #{tpu_custom_call.1} parent=55 // pred_check
          %p2529 = pneg %p197
        $region58: #{tpu_custom_call.1} parent=55 // pred_check_branch
          %2531 = sbr.rel (%p2529) target = $region60
        $region59: #{tpu_custom_call.1} parent=55 // pred_region
          %s2532 = sand.u32 %s182, 1
          %s2533 = scalar_lea.sflag [#allocation3], %s2532
          %s2534 = sand.u32 %s182, 1
          %s2535 = smul.addr %s2534, 8
          %s2536 = scalar_lea.vmem [#allocation2], %s2535
          %2537 = dma.done %s2533, 128
        $region60: #{tpu_custom_call.1} parent=55 // pred_fallthru
          _
      $region56: #{tpu_custom_call.1} parent=5 // pred_fallthru
        _
    $region6: #{tpu_custom_call.1} parent=1 // loop_footer
      %s20 = sadd.s32 1, %s16
    $region7: #{tpu_custom_call.1} parent=1 // loop_footer_branch
      %15 = sbr.rel target = $region3
    $region8: #{tpu_custom_call.1} parent=1 // loop_exit
      _
    %2538 = vsyncpa [#allocation3], 1
    %s2539 = scalar_lea.sflag [#allocation3], 1
    %2540 = vsyncpa %s2539, 1

</llo_original>
